<compile_context>
chip_gen: v5e
topology: v5e:2x2
jax: 0.10.0
libtpu: 0.0.40
codegen_flags: <defaults>
</compile_context>

<pallas_src>
import functools

import numpy as np
import jax
import jax.numpy as jnp
from jax import lax
from jax.experimental import pallas as pl
from jax.experimental.pallas import tpu as pltpu

EPS = 1e-5  # nn.GroupNorm default


def _round_up(x, m):
    return ((x + m - 1) // m) * m


def _make_group_avg_matrix(C, num_groups, n_spatial):
    """Block-diagonal averaging matrix: (sums [1,C]) @ M -> per-channel group mean."""
    cg = C // num_groups
    g = np.arange(C) // cg
    m = (g[:, None] == g[None, :]).astype(np.float32) / float(n_spatial * cg)
    return jnp.asarray(m)


# --------------------------------------------------------------------------
# Kernel 1: fused GroupNorm32 (fp32 stats) + SiLU + factor^3 downsample of
#           both h = SiLU(GN(x)) and the raw x (for the skip path).
# Input is pre-rearranged (wrapper glue) to [B, f^3, Nd, C] so the downsample
# is a plain mean over the leading shard axis (pure VPU, no pool matrix).
# --------------------------------------------------------------------------
def _gn_silu_down_kernel(x_ref, g_ref, b_ref, m_ref, hd_ref, xd_ref, *, inv_f3):
    xs = x_ref[0].astype(jnp.float32)                     # [f3, Nd, C]
    C = xs.shape[-1]
    xsum = jnp.sum(xs, axis=0)                            # [Nd, C]
    s = jnp.sum(xsum, axis=0, keepdims=True)              # [1, C]  sum x
    ss = jnp.sum(jnp.sum(xs * xs, axis=0), axis=0, keepdims=True)  # [1, C] sum x^2
    mean = jnp.dot(s, m_ref[...], preferred_element_type=jnp.float32)   # [1, C]
    ex2 = jnp.dot(ss, m_ref[...], preferred_element_type=jnp.float32)   # [1, C]
    var = ex2 - mean * mean
    scale = g_ref[...] * lax.rsqrt(var + EPS)             # [1, C]
    shift = b_ref[...] - mean * scale                     # [1, C]
    y = xs * scale.reshape(1, 1, C) + shift.reshape(1, 1, C)
    h = y * jax.nn.sigmoid(y)                             # SiLU (sigmoid -> EUP)
    hd_ref[0] = (jnp.sum(h, axis=0) * inv_f3).astype(hd_ref.dtype)
    xd_ref[0] = (xsum * inv_f3).astype(xd_ref.dtype)


def gn_silu_downsample(shards, gamma, beta, bmat):
    # shards: [B, f3, Nd, C]
    B, f3, Nd, C = shards.shape
    out_sh = jax.ShapeDtypeStruct((B, Nd, C), shards.dtype)
    return pl.pallas_call(
        functools.partial(_gn_silu_down_kernel, inv_f3=1.0 / f3),
        out_shape=(out_sh, out_sh),
        grid=(B,),
        in_specs=[
            pl.BlockSpec((1, f3, Nd, C), lambda i: (i, 0, 0, 0)),
            pl.BlockSpec((1, C), lambda i: (0, 0)),
            pl.BlockSpec((1, C), lambda i: (0, 0)),
            pl.BlockSpec((C, C), lambda i: (0, 0)),
        ],
        out_specs=(pl.BlockSpec((1, Nd, C), lambda i: (i, 0, 0)),
                   pl.BlockSpec((1, Nd, C), lambda i: (i, 0, 0))),
        compiler_params=pltpu.CompilerParams(dimension_semantics=("parallel",)),
    )(shards,
      gamma.reshape(1, C).astype(jnp.float32),
      beta.reshape(1, C).astype(jnp.float32),
      bmat)


# --------------------------------------------------------------------------
# Kernel 2: fused GroupNorm32 + SiLU (no downsample), single pass.
# --------------------------------------------------------------------------
def _gn_silu_kernel(x_ref, g_ref, b_ref, m_ref, o_ref):
    x = x_ref[0].astype(jnp.float32)                      # [N, C]
    s = jnp.sum(x, axis=0, keepdims=True)                 # [1, C]
    ss = jnp.sum(x * x, axis=0, keepdims=True)            # [1, C]
    mean = jnp.dot(s, m_ref[...], preferred_element_type=jnp.float32)
    ex2 = jnp.dot(ss, m_ref[...], preferred_element_type=jnp.float32)
    var = ex2 - mean * mean
    scale = g_ref[...] * lax.rsqrt(var + EPS)
    shift = b_ref[...] - mean * scale
    y = x * scale + shift
    o_ref[0] = (y * jax.nn.sigmoid(y)).astype(o_ref.dtype)


def gn_silu(x_flat, gamma, beta, bmat):
    B, N, C = x_flat.shape
    return pl.pallas_call(
        _gn_silu_kernel,
        out_shape=jax.ShapeDtypeStruct((B, N, C), x_flat.dtype),
        grid=(B,),
        in_specs=[
            pl.BlockSpec((1, N, C), lambda i: (i, 0, 0)),
            pl.BlockSpec((1, C), lambda i: (0, 0)),
            pl.BlockSpec((1, C), lambda i: (0, 0)),
            pl.BlockSpec((C, C), lambda i: (0, 0)),
        ],
        out_specs=pl.BlockSpec((1, N, C), lambda i: (i, 0, 0)),
        compiler_params=pltpu.CompilerParams(dimension_semantics=("parallel",)),
    )(x_flat,
      gamma.reshape(1, C).astype(jnp.float32),
      beta.reshape(1, C).astype(jnp.float32),
      bmat)


# --------------------------------------------------------------------------
# Kernel 3: 3x3x3 conv (padding=1) as 27 shifted bf16 matmuls with an fp32
# accumulator, fused bias and optional fused residual add.
# The padded activation is flattened to [B, Nflat, Cin]; tap (kd,kh,kw) is a
# contiguous row slice at static offset kd*Hp*Wp + kh*Wp + kw from the output
# tile's base row.  The full flat activation stays resident in VMEM per batch;
# the output is tiled over N rows (grid=(B, n_tiles)).  No im2col in HBM.
# --------------------------------------------------------------------------
def _make_conv_kernel(tn, cout, offsets, has_res):
    def kernel(*refs):
        if has_res:
            x_ref, w_ref, b_ref, r_ref, o_ref = refs
        else:
            x_ref, w_ref, b_ref, o_ref = refs
            r_ref = None
        base = pl.multiple_of(pl.program_id(1) * tn, 8)
        acc = jnp.zeros((tn, cout), jnp.float32)
        for t, off in enumerate(offsets):                 # static unroll (27 taps)
            patch = x_ref[0, pl.ds(base + off, tn), :].astype(jnp.bfloat16)
            acc = acc + jnp.dot(patch, w_ref[t],          # bf16 x bf16 -> f32 acc
                                preferred_element_type=jnp.float32)
        acc = acc + b_ref[...].astype(jnp.float32)
        if has_res:
            acc = acc + r_ref[0].astype(jnp.float32)
        o_ref[0] = acc.astype(o_ref.dtype)
    return kernel


def conv3d_3x3(x_flat, spatial, w, b, residual=None, tile_n=512):
    # x_flat: [B, Nd, Cin]; w: torch layout [Cout, Cin, 3, 3, 3]; padding=1
    B, Nd, Cin = x_flat.shape
    Dd, Hd, Wd = spatial
    assert Nd == Dd * Hd * Wd
    Cout = w.shape[0]
    Dp, Hp, Wp = Dd + 2, Hd + 2, Wd + 2

    offsets = [kd * Hp * Wp + kh * Wp + kw
               for kd in range(3) for kh in range(3) for kw in range(3)]
    max_off = offsets[-1]
    rows_needed = Dd * Hp * Wp            # output rows in "tail-padded" flat layout
    tn = _round_up(min(tile_n, rows_needed), 8)
    n_tiles = -(-rows_needed // tn)
    out_rows = n_tiles * tn
    in_rows = out_rows + max_off

    # Padded, flattened activation (wrapper glue: one pad, one reshape).
    xin = x_flat.reshape(B, Dd, Hd, Wd, Cin)
    xin = jnp.pad(xin, ((0, 0), (1, 1), (1, 1), (1, 1), (0, 0)))
    xin = xin.reshape(B, Dp * Hp * Wp, Cin)
    xin = jnp.pad(xin, ((0, 0), (0, in_rows - Dp * Hp * Wp), (0, 0)))

    # Weights: [Cout, Cin, 3,3,3] -> [27, Cin, Cout], bf16 (halves weight DMA).
    w27 = jnp.transpose(w, (2, 3, 4, 1, 0)).reshape(27, Cin, Cout).astype(jnp.bfloat16)
    bias = b.reshape(1, Cout).astype(jnp.float32)

    in_specs = [
        pl.BlockSpec((1, in_rows, Cin), lambda bi, nt: (bi, 0, 0)),  # resident/batch
        pl.BlockSpec((27, Cin, Cout), lambda bi, nt: (0, 0, 0)),
        pl.BlockSpec((1, Cout), lambda bi, nt: (0, 0)),
    ]
    args = [xin, w27, bias]
    has_res = residual is not None
    if has_res:
        # Residual laid out in the same tail-padded flat row indexing.
        rvol = residual.reshape(B, Dd, Hd, Wd, Cout)
        rflat = jnp.pad(rvol, ((0, 0), (0, 0), (0, Hp - Hd), (0, Wp - Wd), (0, 0)))
        rflat = rflat.reshape(B, Dd * Hp * Wp, Cout)
        rflat = jnp.pad(rflat, ((0, 0), (0, out_rows - Dd * Hp * Wp), (0, 0)))
        in_specs.append(pl.BlockSpec((1, tn, Cout), lambda bi, nt: (bi, nt, 0)))
        args.append(rflat)

    out = pl.pallas_call(
        _make_conv_kernel(tn, Cout, offsets, has_res),
        out_shape=jax.ShapeDtypeStruct((B, out_rows, Cout), x_flat.dtype),
        grid=(B, n_tiles),
        in_specs=in_specs,
        out_specs=pl.BlockSpec((1, tn, Cout), lambda bi, nt: (bi, nt, 0)),
        compiler_params=pltpu.CompilerParams(
            dimension_semantics=("parallel", "parallel"),
            vmem_limit_bytes=32 * 1024 * 1024),
    )(*args)

    # Extract valid rows (wrapper glue): drop pad-coordinate outputs.
    out = out[:, :Dd * Hp * Wp, :].reshape(B, Dd, Hp, Wp, Cout)
    return out[:, :, :Hd, :Wd, :].reshape(B, Nd, Cout)


# --------------------------------------------------------------------------
# 1x1x1 conv (skip path when out_channels != channels)
# --------------------------------------------------------------------------
def _pointwise_kernel(x_ref, w_ref, b_ref, o_ref):
    acc = jnp.dot(x_ref[0].astype(jnp.bfloat16), w_ref[...],
                  preferred_element_type=jnp.float32)
    o_ref[0] = (acc + b_ref[...].astype(jnp.float32)).astype(o_ref.dtype)


def pointwise_conv(x_flat, w, b):
    B, Nd, Cin = x_flat.shape
    Cout = w.shape[0]
    w2 = w.reshape(Cout, Cin).T.astype(jnp.bfloat16)      # [Cin, Cout]
    return pl.pallas_call(
        _pointwise_kernel,
        out_shape=jax.ShapeDtypeStruct((B, Nd, Cout), x_flat.dtype),
        grid=(B,),
        in_specs=[
            pl.BlockSpec((1, Nd, Cin), lambda i: (i, 0, 0)),
            pl.BlockSpec((Cin, Cout), lambda i: (0, 0)),
            pl.BlockSpec((1, Cout), lambda i: (0, 0)),
        ],
        out_specs=pl.BlockSpec((1, Nd, Cout), lambda i: (i, 0, 0)),
        compiler_params=pltpu.CompilerParams(dimension_semantics=("parallel",)),
    )(x_flat, w2, b.reshape(1, Cout).astype(jnp.float32))


# --------------------------------------------------------------------------
# Full SparseDownBlock3d_v2 forward
# --------------------------------------------------------------------------
def sparse_down_block_forward(x, params, num_groups, factor=2, tile_n=512):
    # x: [B, D, H, W, C]  (dense stand-in for the sparse tensor)
    B, D, H, W, C = x.shape
    f = factor
    f3 = f ** 3
    Dd, Hd, Wd = D // f, H // f, W // f
    Nd = Dd * Hd * Wd
    Cout = params["conv1_w"].shape[0]

    # Space-to-depth rearrangement (wrapper glue): [B, f^3, Nd, C].
    shards = (x.reshape(B, Dd, f, Hd, f, Wd, f, C)
                .transpose(0, 2, 4, 6, 1, 3, 5, 7)
                .reshape(B, f3, Nd, C))

    # act_layers (GN32 + SiLU) fused with down(h) and down(x).
    bmat1 = _make_group_avg_matrix(C, num_groups, f3 * Nd)
    h_down, x_down = gn_silu_downsample(shards, params["gn1_w"], params["gn1_b"], bmat1)

    # skip_connection
    if Cout == C:
        skip = x_down                                     # nn.Identity
    else:
        skip = pointwise_conv(x_down, params["skip_w"], params["skip_b"])

    # out_layers: Conv3d -> GN32 -> SiLU -> Conv3d, final conv fuses +skip.
    h1 = conv3d_3x3(h_down, (Dd, Hd, Wd), params["conv1_w"], params["conv1_b"],
                    residual=None, tile_n=tile_n)
    bmat2 = _make_group_avg_matrix(Cout, num_groups, Nd)
    h1 = gn_silu(h1, params["gn2_w"], params["gn2_b"], bmat2)
    out = conv3d_3x3(h1, (Dd, Hd, Wd), params["conv2_w"], params["conv2_b"],
                     residual=skip, tile_n=tile_n)
    return out.reshape(B, Dd, Hd, Wd, Cout)


# --------------------------------------------------------------------------
# Pure-JAX reference (dense semantics of the PyTorch module)
# --------------------------------------------------------------------------
def ref_forward(x, params, num_groups, factor=2):
    def gn(v, w, b):
        B, D, H, W, C = v.shape
        vr = v.reshape(B, D * H * W, num_groups, C // num_groups)
        mean = vr.mean(axis=(1, 3), keepdims=True)
        var = ((vr - mean) ** 2).mean(axis=(1, 3), keepdims=True)
        vn = ((vr - mean) / jnp.sqrt(var + EPS)).reshape(B, D, H, W, C)
        return vn * w + b

    def silu(v):
        return v * jax.nn.sigmoid(v)

    def down(v):
        B, D, H, W, C = v.shape
        f = factor
        return v.reshape(B, D // f, f, H // f, f, W // f, f, C).mean(axis=(2, 4, 6))

    def conv(v, w, b):
        wj = jnp.transpose(w, (2, 3, 4, 1, 0))  # DHWIO
        y = lax.conv_general_dilated(
            v, wj, (1, 1, 1), "SAME",
            dimension_numbers=("NDHWC", "DHWIO", "NDHWC"),
            precision=lax.Precision.HIGHEST)
        return y + b

    h = silu(gn(x, params["gn1_w"], params["gn1_b"]))
    h = down(h)
    xd = down(x)
    h = conv(h, params["conv1_w"], params["conv1_b"])
    h = silu(gn(h, params["gn2_w"], params["gn2_b"]))
    h = conv(h, params["conv2_w"], params["conv2_b"])
    return h + xd  # out_channels == channels -> Identity skip


if __name__ == "__main__":
    B, C, D = 2, 32, 8          # channels=32, spatial 8^3, factor=2 -> 4^3
    num_groups = 8
    factor = 2

    key = jax.random.PRNGKey(0)
    ks = jax.random.split(key, 10)
    x = jax.random.normal(ks[0], (B, D, D, D, C), jnp.float32)

    params = {
        "gn1_w": 1.0 + 0.1 * jax.random.normal(ks[1], (C,), jnp.float32),
        "gn1_b": 0.1 * jax.random.normal(ks[2], (C,), jnp.float32),
        "conv1_w": 0.1 * jax.random.normal(ks[3], (C, C, 3, 3, 3), jnp.float32),
        "conv1_b": 0.05 * jax.random.normal(ks[4], (C,), jnp.float32),
        "gn2_w": 1.0 + 0.1 * jax.random.normal(ks[5], (C,), jnp.float32),
        "gn2_b": 0.1 * jax.random.normal(ks[6], (C,), jnp.float32),
        "conv2_w": 0.1 * jax.random.normal(ks[7], (C, C, 3, 3, 3), jnp.float32),
        "conv2_b": 0.05 * jax.random.normal(ks[8], (C,), jnp.float32),
    }

    out = sparse_down_block_forward(x, params, num_groups=num_groups, factor=factor)
    out = jax.block_until_ready(out)

    ref = ref_forward(x, params, num_groups=num_groups, factor=factor)
    err = float(jnp.max(jnp.abs(out - ref)))
    scale = float(jnp.max(jnp.abs(ref)))
    # bf16 MXU operands with fp32 accumulation -> small relative error vs f32 ref
    assert err <= 3e-2 * scale + 1e-3, f"max abs err {err} (ref scale {scale})"
    print("KERNEL_OK")
</pallas_src>

<mosaic_0001>
module attributes {stable_mosaic.version = 11 : i64} {
  func.func @_gn_silu_down_kernel(%arg0: i32, %arg1: memref<1x8x64x32xf32, #tpu.memory_space<vmem>>, %arg2: memref<1x32xf32, #tpu.memory_space<vmem>>, %arg3: memref<1x32xf32, #tpu.memory_space<vmem>>, %arg4: memref<32x32xf32, #tpu.memory_space<vmem>>, %arg5: memref<1x64x32xf32, #tpu.memory_space<vmem>>, %arg6: memref<1x64x32xf32, #tpu.memory_space<vmem>>) attributes {dimension_semantics = [#tpu.dimension_semantics<parallel>], iteration_bounds = array<i64: 2>, scalar_prefetch = 0 : i64, scratch_operands = 0 : i64, tpu.core_type = #tpu.core_type<tc>, window_params = [{transform_indices = @transform_0, window_bounds = array<i64: 1, 8, 64, 32>}, {pipeline_mode = #tpu.pipeline_mode<synchronous>, transform_indices = @transform_1, window_bounds = array<i64: 1, 32>}, {pipeline_mode = #tpu.pipeline_mode<synchronous>, transform_indices = @transform_2, window_bounds = array<i64: 1, 32>}, {pipeline_mode = #tpu.pipeline_mode<synchronous>, transform_indices = @transform_3, window_bounds = array<i64: 32, 32>}, {transform_indices = @transform_4, window_bounds = array<i64: 1, 64, 32>}, {transform_indices = @transform_5, window_bounds = array<i64: 1, 64, 32>}]} {
    %c0 = arith.constant 0 : index
    %c0_0 = arith.constant 0 : index
    %c0_1 = arith.constant 0 : index
    %c0_2 = arith.constant 0 : index
    %0 = vector.load %arg1[%c0, %c0_0, %c0_1, %c0_2] : memref<1x8x64x32xf32, #tpu.memory_space<vmem>>, vector<1x8x64x32xf32>
    %1 = vector.shape_cast %0 : vector<1x8x64x32xf32> to vector<8x64x32xf32>
    %cst = arith.constant dense<0.000000e+00> : vector<64x32xf32>
    %2 = vector.multi_reduction <add>, %1, %cst [0] : vector<8x64x32xf32> to vector<64x32xf32>
    %cst_3 = arith.constant dense<0.000000e+00> : vector<32xf32>
    %3 = vector.multi_reduction <add>, %2, %cst_3 [0] : vector<64x32xf32> to vector<32xf32>
    %4 = vector.shape_cast %3 : vector<32xf32> to vector<1x32xf32>
    %5 = arith.mulf %1, %1 : vector<8x64x32xf32>
    %cst_4 = arith.constant dense<0.000000e+00> : vector<64x32xf32>
    %6 = vector.multi_reduction <add>, %5, %cst_4 [0] : vector<8x64x32xf32> to vector<64x32xf32>
    %cst_5 = arith.constant dense<0.000000e+00> : vector<32xf32>
    %7 = vector.multi_reduction <add>, %6, %cst_5 [0] : vector<64x32xf32> to vector<32xf32>
    %8 = vector.shape_cast %7 : vector<32xf32> to vector<1x32xf32>
    %c0_6 = arith.constant 0 : index
    %c0_7 = arith.constant 0 : index
    %9 = vector.load %arg4[%c0_6, %c0_7] : memref<32x32xf32, #tpu.memory_space<vmem>>, vector<32x32xf32>
    %cst_8 = arith.constant dense<0.000000e+00> : vector<1x32xf32>
    %10 = tpu.matmul %4, %9, %cst_8 {dimension_numbers = #tpu.dot_dimension_numbers<[1], [0], [0], [1], [0, 0, 1, 1], [], []>} : vector<1x32xf32>, vector<32x32xf32>, vector<1x32xf32> -> vector<1x32xf32>
    %c0_9 = arith.constant 0 : index
    %c0_10 = arith.constant 0 : index
    %11 = vector.load %arg4[%c0_9, %c0_10] : memref<32x32xf32, #tpu.memory_space<vmem>>, vector<32x32xf32>
    %cst_11 = arith.constant dense<0.000000e+00> : vector<1x32xf32>
    %12 = tpu.matmul %8, %11, %cst_11 {dimension_numbers = #tpu.dot_dimension_numbers<[1], [0], [0], [1], [0, 0, 1, 1], [], []>} : vector<1x32xf32>, vector<32x32xf32>, vector<1x32xf32> -> vector<1x32xf32>
    %13 = arith.mulf %10, %10 : vector<1x32xf32>
    %14 = arith.subf %12, %13 : vector<1x32xf32>
    %c0_12 = arith.constant 0 : index
    %c0_13 = arith.constant 0 : index
    %15 = vector.load %arg2[%c0_12, %c0_13] : memref<1x32xf32, #tpu.memory_space<vmem>>, vector<1x32xf32>
    %cst_14 = arith.constant 9.99999974E-6 : f32
    %16 = vector.broadcast %cst_14 : f32 to vector<1x32xf32>
    %17 = arith.addf %14, %16 : vector<1x32xf32>
    %18 = math.rsqrt %17 : vector<1x32xf32>
    %19 = arith.mulf %15, %18 : vector<1x32xf32>
    %c0_15 = arith.constant 0 : index
    %c0_16 = arith.constant 0 : index
    %20 = vector.load %arg3[%c0_15, %c0_16] : memref<1x32xf32, #tpu.memory_space<vmem>>, vector<1x32xf32>
    %21 = arith.mulf %10, %19 : vector<1x32xf32>
    %22 = arith.subf %20, %21 : vector<1x32xf32>
    %23 = vector.shape_cast %19 : vector<1x32xf32> to vector<1x1x32xf32>
    %24 = vector.broadcast %23 : vector<1x1x32xf32> to vector<8x64x32xf32>
    %25 = arith.mulf %1, %24 : vector<8x64x32xf32>
    %26 = vector.shape_cast %22 : vector<1x32xf32> to vector<1x1x32xf32>
    %27 = vector.broadcast %26 : vector<1x1x32xf32> to vector<8x64x32xf32>
    %28 = arith.addf %25, %27 : vector<8x64x32xf32>
    %29 = arith.negf %28 : vector<8x64x32xf32>
    %30 = math.exp %29 : vector<8x64x32xf32>
    %cst_17 = arith.constant 1.000000e+00 : f32
    %31 = vector.broadcast %cst_17 : f32 to vector<8x64x32xf32>
    %32 = arith.addf %31, %30 : vector<8x64x32xf32>
    %33 = arith.divf %31, %32 : vector<8x64x32xf32>
    %34 = arith.mulf %28, %33 : vector<8x64x32xf32>
    %cst_18 = arith.constant dense<0.000000e+00> : vector<64x32xf32>
    %35 = vector.multi_reduction <add>, %34, %cst_18 [0] : vector<8x64x32xf32> to vector<64x32xf32>
    %cst_19 = arith.constant 1.250000e-01 : f32
    %36 = vector.broadcast %cst_19 : f32 to vector<64x32xf32>
    %37 = arith.mulf %35, %36 : vector<64x32xf32>
    %c0_20 = arith.constant 0 : index
    %c0_21 = arith.constant 0 : index
    %c0_22 = arith.constant 0 : index
    %38 = vector.load %arg5[%c0_20, %c0_21, %c0_22] : memref<1x64x32xf32, #tpu.memory_space<vmem>>, vector<1x64x32xf32>
    %39 = vector.shape_cast %38 : vector<1x64x32xf32> to vector<64x32xf32>
    %40 = vector.shape_cast %37 : vector<64x32xf32> to vector<1x64x32xf32>
    tpu.vector_store %arg5[%c0_20, %c0_21, %c0_22], %40 {strides = array<i32>} : memref<1x64x32xf32, #tpu.memory_space<vmem>>, vector<1x64x32xf32>,
    %cst_23 = arith.constant 1.250000e-01 : f32
    %41 = vector.broadcast %cst_23 : f32 to vector<64x32xf32>
    %42 = arith.mulf %2, %41 : vector<64x32xf32>
    %c0_24 = arith.constant 0 : index
    %c0_25 = arith.constant 0 : index
    %c0_26 = arith.constant 0 : index
    %43 = vector.load %arg6[%c0_24, %c0_25, %c0_26] : memref<1x64x32xf32, #tpu.memory_space<vmem>>, vector<1x64x32xf32>
    %44 = vector.shape_cast %43 : vector<1x64x32xf32> to vector<64x32xf32>
    %45 = vector.shape_cast %42 : vector<64x32xf32> to vector<1x64x32xf32>
    tpu.vector_store %arg6[%c0_24, %c0_25, %c0_26], %45 {strides = array<i32>} : memref<1x64x32xf32, #tpu.memory_space<vmem>>, vector<1x64x32xf32>,
    return
  }
  func.func @transform_0(%arg0: i32) -> (i32, i32, i32, i32) {
    %c0_i32 = arith.constant 0 : i32
    %c0_i32_0 = arith.constant 0 : i32
    %c0_i32_1 = arith.constant 0 : i32
    %c0_i32_2 = arith.constant 0 : i32
    return %arg0, %c0_i32, %c0_i32_0, %c0_i32_1 : i32, i32, i32, i32
  }
  func.func @transform_1(%arg0: i32) -> (i32, i32) {
    %c0_i32 = arith.constant 0 : i32
    %c0_i32_0 = arith.constant 0 : i32
    %c0_i32_1 = arith.constant 0 : i32
    return %c0_i32, %c0_i32_0 : i32, i32
  }
  func.func @transform_2(%arg0: i32) -> (i32, i32) {
    %c0_i32 = arith.constant 0 : i32
    %c0_i32_0 = arith.constant 0 : i32
    %c0_i32_1 = arith.constant 0 : i32
    return %c0_i32, %c0_i32_0 : i32, i32
  }
  func.func @transform_3(%arg0: i32) -> (i32, i32) {
    %c0_i32 = arith.constant 0 : i32
    %c0_i32_0 = arith.constant 0 : i32
    %c0_i32_1 = arith.constant 0 : i32
    return %c0_i32, %c0_i32_0 : i32, i32
  }
  func.func @transform_4(%arg0: i32) -> (i32, i32, i32) {
    %c0_i32 = arith.constant 0 : i32
    %c0_i32_0 = arith.constant 0 : i32
    %c0_i32_1 = arith.constant 0 : i32
    return %arg0, %c0_i32, %c0_i32_0 : i32, i32, i32
  }
  func.func @transform_5(%arg0: i32) -> (i32, i32, i32) {
    %c0_i32 = arith.constant 0 : i32
    %c0_i32_0 = arith.constant 0 : i32
    %c0_i32_1 = arith.constant 0 : i32
    return %arg0, %c0_i32, %c0_i32_0 : i32, i32, i32
  }
}

</mosaic_0001>

<llo_original>
// kernel: tpu_custom_call.1
$region0: #{tpu_custom_call.1}
  #allocation0 [shape = 'u32[]', space=smem, size = 0x4, offset = 0x4, fixed_abs, tag = 'smem constant byte address 0x4 - core index']
  #allocation1 [shape = 'u32[72,128]{1,0:T(1,128)}', space=vmem, size = 0x9000, scoped, tag = 'internal scratch']
  %s0 = inlined_call_operand.vmem [shape: f32[2,8,64,32], index: 0, kind: input, shape index: {}]
  %s1 = inlined_call_operand.vmem [shape: f32[1,32], index: 1, kind: input, shape index: {}]
  %s2 = inlined_call_operand.vmem [shape: f32[1,32], index: 2, kind: input, shape index: {}]
  %s3 = inlined_call_operand.vmem [shape: f32[32,32], index: 3, kind: input, shape index: {}]
  %s4 = inlined_call_operand.vmem [shape: f32[2,64,32], index: 4, kind: output, shape index: {0}]
  %s5 = inlined_call_operand.vmem [shape: f32[2,64,32], index: 5, kind: output, shape index: {1}]
  %6 = xla_tuple %s4, %s5
  %s7 = sld [smem:[#allocation0]]
  $region57: #{tpu_custom_call.1} parent=0
    _
  %s9 = ssub.s32 1, %s7
  %s10 = scalar_select 0, %s9, %s7
  loop: start=0, step=1, limit=4
  $region2: #{tpu_custom_call.1} parent=0 // loop_pre_header
    _
  $region3: #{tpu_custom_call.1} parent=0 // loop_header
    %s12 = sphi 0, %s16
    %p13 = scmp.ge.s32.totalorder %s12, 4
    %s22 = sphi 0, %s24
    %s25 = sphi 0, %s22
    %s26 = sphi 0, %s25
    %s42 = sphi 0, %s26
    %s46 = sphi 0, %s46
    %s48 = sphi 0, %s46
    %s49 = sphi 0, %s48
    %s63 = sphi 0, %s49
    %s67 = sphi 0, %s67
    %s69 = sphi 0, %s67
    %s70 = sphi 0, %s69
    %s84 = sphi 0, %s70
    %s88 = sphi 0, %s88
    %s90 = sphi 0, %s88
    %s91 = sphi 0, %s90
    %s105 = sphi 0, %s91
    %s111 = sphi 0, %s113
    %s114 = sphi 0, %s111
    %s115 = sphi 0, %s114
    %s131 = sphi 0, %s115
    %s137 = sphi 0, %s139
    %s140 = sphi 0, %s137
    %s141 = sphi 0, %s140
    %s157 = sphi 0, %s141
  $region4: #{tpu_custom_call.1} parent=0 // loop_header_branch
    %15 = sbr.rel (%p13) target = $region8
  $region5: #{tpu_custom_call.1} parent=0 // loop_body
    %s17 = ssub.s32 %s12, 1
    %s18 = ssub.s32 %s12, 2
    %s19 = sadd.s32 %s12, 1
    %s20 = ssub.s32 %s12, %s19
    %p21 = scmp.eq.s32.totalorder %s20, 0
    %s23 = sadd.s32 %s22, 1
    %s24 = scalar_select %p21, %s22, %s23
    %p27 = pneg %p21
    %p28 = scmp.eq.s32.totalorder %s12, 1
    %p29 = por %p27, %p28
    %p30 = scmp.ne.s32.totalorder %s22, %s25
    %p31 = scmp.eq.s32.totalorder %s12, 0
    %p32 = por %p30, %p31
    %p33 = scmp.ne.s32.totalorder %s22, %s25
    %p34 = scmp.eq.s32.totalorder %s17, 1
    %p35 = por %p33, %p34
    %p36 = scmp.ne.s32.totalorder %s25, %s26
    %p37 = scmp.eq.s32.totalorder %s17, 0
    %p38 = por %p36, %p37
    %p39 = scmp.ne.s32.totalorder %s25, %s26
    %p40 = scmp.eq.s32.totalorder %s18, 1
    %p41 = por %p39, %p40
    %p43 = scmp.ne.s32.totalorder %s26, %s42
    %p44 = scmp.eq.s32.totalorder %s18, 0
    %p45 = por %p43, %p44
    %s47 = sadd.s32 %s46, 1
    %p50 = scmp.eq.s32.totalorder %s12, 1
    %p51 = scmp.ne.s32.totalorder %s46, %s48
    %p52 = scmp.eq.s32.totalorder %s12, 0
    %p53 = por %p51, %p52
    %p54 = scmp.ne.s32.totalorder %s46, %s48
    %p55 = scmp.eq.s32.totalorder %s17, 1
    %p56 = por %p54, %p55
    %p57 = scmp.ne.s32.totalorder %s48, %s49
    %p58 = scmp.eq.s32.totalorder %s17, 0
    %p59 = por %p57, %p58
    %p60 = scmp.ne.s32.totalorder %s48, %s49
    %p61 = scmp.eq.s32.totalorder %s18, 1
    %p62 = por %p60, %p61
    %p64 = scmp.ne.s32.totalorder %s49, %s63
    %p65 = scmp.eq.s32.totalorder %s18, 0
    %p66 = por %p64, %p65
    %s68 = sadd.s32 %s67, 1
    %p71 = scmp.eq.s32.totalorder %s12, 1
    %p72 = scmp.ne.s32.totalorder %s67, %s69
    %p73 = scmp.eq.s32.totalorder %s12, 0
    %p74 = por %p72, %p73
    %p75 = scmp.ne.s32.totalorder %s67, %s69
    %p76 = scmp.eq.s32.totalorder %s17, 1
    %p77 = por %p75, %p76
    %p78 = scmp.ne.s32.totalorder %s69, %s70
    %p79 = scmp.eq.s32.totalorder %s17, 0
    %p80 = por %p78, %p79
    %p81 = scmp.ne.s32.totalorder %s69, %s70
    %p82 = scmp.eq.s32.totalorder %s18, 1
    %p83 = por %p81, %p82
    %p85 = scmp.ne.s32.totalorder %s70, %s84
    %p86 = scmp.eq.s32.totalorder %s18, 0
    %p87 = por %p85, %p86
    %s89 = sadd.s32 %s88, 1
    %p92 = scmp.eq.s32.totalorder %s12, 1
    %p93 = scmp.ne.s32.totalorder %s88, %s90
    %p94 = scmp.eq.s32.totalorder %s12, 0
    %p95 = por %p93, %p94
    %p96 = scmp.ne.s32.totalorder %s88, %s90
    %p97 = scmp.eq.s32.totalorder %s17, 1
    %p98 = por %p96, %p97
    %p99 = scmp.ne.s32.totalorder %s90, %s91
    %p100 = scmp.eq.s32.totalorder %s17, 0
    %p101 = por %p99, %p100
    %p102 = scmp.ne.s32.totalorder %s90, %s91
    %p103 = scmp.eq.s32.totalorder %s18, 1
    %p104 = por %p102, %p103
    %p106 = scmp.ne.s32.totalorder %s91, %s105
    %p107 = scmp.eq.s32.totalorder %s18, 0
    %p108 = por %p106, %p107
    %s109 = ssub.s32 %s12, %s19
    %p110 = scmp.eq.s32.totalorder %s109, 0
    %s112 = sadd.s32 %s111, 1
    %s113 = scalar_select %p110, %s111, %s112
    %p116 = pneg %p110
    %p117 = scmp.eq.s32.totalorder %s12, 1
    %p118 = por %p116, %p117
    %p119 = scmp.ne.s32.totalorder %s111, %s114
    %p120 = scmp.eq.s32.totalorder %s12, 0
    %p121 = por %p119, %p120
    %p122 = scmp.ne.s32.totalorder %s111, %s114
    %p123 = scmp.eq.s32.totalorder %s17, 1
    %p124 = por %p122, %p123
    %p125 = scmp.ne.s32.totalorder %s114, %s115
    %p126 = scmp.eq.s32.totalorder %s17, 0
    %p127 = por %p125, %p126
    %p128 = scmp.ne.s32.totalorder %s114, %s115
    %p129 = scmp.eq.s32.totalorder %s18, 1
    %p130 = por %p128, %p129
    %p132 = scmp.ne.s32.totalorder %s115, %s131
    %p133 = scmp.eq.s32.totalorder %s18, 0
    %p134 = por %p132, %p133
    %s135 = ssub.s32 %s12, %s19
    %p136 = scmp.eq.s32.totalorder %s135, 0
    %s138 = sadd.s32 %s137, 1
    %s139 = scalar_select %p136, %s137, %s138
    %p142 = pneg %p136
    %p143 = scmp.eq.s32.totalorder %s12, 1
    %p144 = por %p142, %p143
    %p145 = scmp.ne.s32.totalorder %s137, %s140
    %p146 = scmp.eq.s32.totalorder %s12, 0
    %p147 = por %p145, %p146
    %p148 = scmp.ne.s32.totalorder %s137, %s140
    %p149 = scmp.eq.s32.totalorder %s17, 1
    %p150 = por %p148, %p149
    %p151 = scmp.ne.s32.totalorder %s140, %s141
    %p152 = scmp.eq.s32.totalorder %s17, 0
    %p153 = por %p151, %p152
    %p154 = scmp.ne.s32.totalorder %s140, %s141
    %p155 = scmp.eq.s32.totalorder %s18, 1
    %p156 = por %p154, %p155
    %p158 = scmp.ne.s32.totalorder %s141, %s157
    %p159 = scmp.eq.s32.totalorder %s18, 0
    %p160 = por %p158, %p159
    %p161 = scmp.le.s32.totalorder 1, %s12
    %p162 = scmp.lt.s32.totalorder %s12, 3
    %p163 = pnand %p161, %p162
    %p164 = pneg %p163
    // Predicated region
    $region9: #{tpu_custom_call.1} parent=5 // pred_check
      _
    $region10: #{tpu_custom_call.1} parent=5 // pred_check_branch
      %166 = sbr.rel (%p163) target = $region12
    $region11: #{tpu_custom_call.1} parent=5 // pred_region
      %s167 = ssub.s32 %s12, 1
      // Predicated region
      $region13: #{tpu_custom_call.1} parent=11 // pred_check
        %p168 = pneg %p59
      $region14: #{tpu_custom_call.1} parent=11 // pred_check_branch
        %170 = sbr.rel (%p168) target = $region16
      $region15: #{tpu_custom_call.1} parent=11 // pred_region
        _
      $region16: #{tpu_custom_call.1} parent=11 // pred_fallthru
        _
      // Predicated region
      $region17: #{tpu_custom_call.1} parent=11 // pred_check
        %p171 = pneg %p80
      $region18: #{tpu_custom_call.1} parent=11 // pred_check_branch
        %173 = sbr.rel (%p171) target = $region20
      $region19: #{tpu_custom_call.1} parent=11 // pred_region
        _
      $region20: #{tpu_custom_call.1} parent=11 // pred_fallthru
        _
      // Predicated region
      $region21: #{tpu_custom_call.1} parent=11 // pred_check
        %p174 = pneg %p101
      $region22: #{tpu_custom_call.1} parent=11 // pred_check_branch
        %176 = sbr.rel (%p174) target = $region24
      $region23: #{tpu_custom_call.1} parent=11 // pred_region
        _
      $region24: #{tpu_custom_call.1} parent=11 // pred_fallthru
        _
    $region12: #{tpu_custom_call.1} parent=5 // pred_fallthru
      _
    %p177 = scmp.lt.s32.totalorder %s12, 2
    // Predicated region
    $region25: #{tpu_custom_call.1} parent=5 // pred_check
      %p178 = pneg %p177
    $region26: #{tpu_custom_call.1} parent=5 // pred_check_branch
      %180 = sbr.rel (%p178) target = $region28
    $region27: #{tpu_custom_call.1} parent=5 // pred_region
      // Predicated region
      $region29: #{tpu_custom_call.1} parent=27 // pred_check
        %p181 = pneg %p32
      $region30: #{tpu_custom_call.1} parent=27 // pred_check_branch
        %183 = sbr.rel (%p181) target = $region32
      $region31: #{tpu_custom_call.1} parent=27 // pred_region
        %p184 = scmp.lt.s32.totalorder %s12, 1
        %s185 = scalar_select %p184, %s12, 1
        %s186 = smul.addr %s185, 64
        %s187 = smul.addr %s186, 8
        %s188 = scalar_lea.vmem %s0, %s187
      $region32: #{tpu_custom_call.1} parent=27 // pred_fallthru
        _
    $region28: #{tpu_custom_call.1} parent=5 // pred_fallthru
      _
    %p189 = scmp.le.s32.totalorder 1, %s12
    %p190 = scmp.lt.s32.totalorder %s12, 3
    %p191 = pnand %p189, %p190
    %p192 = pneg %p191
    // Predicated region
    $region33: #{tpu_custom_call.1} parent=5 // pred_check
      _
    $region34: #{tpu_custom_call.1} parent=5 // pred_check_branch
      %194 = sbr.rel (%p191) target = $region36
    $region35: #{tpu_custom_call.1} parent=5 // pred_region
      %s195 = ssub.s32 %s12, 1
      %p196 = scmp.lt.s32.totalorder %s17, 1
      %s197 = scalar_select %p196, %s17, 1
      %s198 = smul.addr %s197, 64
      %s199 = smul.addr %s198, 8
      %s200 = scalar_lea.vmem %s0, %s199
      %p201 = pneg %p38
      %p202 = pneg %p35
      %p203 = pneg %p59
      %p204 = pneg %p56
      %p205 = pneg %p80
      %p206 = pneg %p77
      %p207 = pneg %p101
      %p208 = pneg %p98
      %p209 = pneg %p127
      %p210 = pneg %p124
      %p211 = scmp.lt.s32.totalorder %s17, 1
      %s212 = scalar_select %p211, %s17, 1
      %s213 = smul.addr %s212, 8
      %s214 = smul.addr %s213, 8
      %s215 = scalar_lea.vmem %s4, %s214
      %p216 = pneg %p153
      %p217 = pneg %p150
      %p218 = scmp.lt.s32.totalorder %s17, 1
      %s219 = scalar_select %p218, %s17, 1
      %s220 = smul.addr %s219, 8
      %s221 = smul.addr %s220, 8
      %s222 = scalar_lea.vmem %s5, %s221
      %p223 = scmp.lt.s32.totalorder %s17, 1
      %s224 = scalar_select %p223, %s17, 1
      %s225 = smul.addr %s224, 64
      %s226 = smul.addr %s225, 8
      %s227 = scalar_lea.vmem %s0, %s226
      %p228 = scmp.lt.s32.totalorder %s17, 1
      %s229 = scalar_select %p228, %s17, 1
      %s230 = smul.addr %s229, 8
      %s231 = smul.addr %s230, 8
      %s232 = scalar_lea.vmem %s4, %s231
      %p233 = scmp.lt.s32.totalorder %s17, 1
      %s234 = scalar_select %p233, %s17, 1
      %s235 = smul.addr %s234, 8
      %s236 = smul.addr %s235, 8
      %s237 = scalar_lea.vmem %s5, %s236
      %v238 = vld [vmem:[%s227] sm:$0xff]
      %v239 = vld [vmem:[%s227 + $0x8] sm:$0xff]
      %v240 = vld [vmem:[%s227 + $0x10] sm:$0xff]
      %v241 = vld [vmem:[%s227 + $0x18] sm:$0xff]
      %v242 = vld [vmem:[%s227 + $0x20] sm:$0xff]
      %v243 = vld [vmem:[%s227 + $0x28] sm:$0xff]
      %v244 = vld [vmem:[%s227 + $0x30] sm:$0xff]
      %v245 = vld [vmem:[%s227 + $0x38] sm:$0xff]
      %v246 = vld [vmem:[%s227 + $0x40] sm:$0xff]
      %v247 = vld [vmem:[%s227 + $0x48] sm:$0xff]
      %v248 = vld [vmem:[%s227 + $0x50] sm:$0xff]
      %v249 = vld [vmem:[%s227 + $0x58] sm:$0xff]
      %v250 = vld [vmem:[%s227 + $0x60] sm:$0xff]
      %v251 = vld [vmem:[%s227 + $0x68] sm:$0xff]
      %v252 = vld [vmem:[%s227 + $0x70] sm:$0xff]
      %v253 = vld [vmem:[%s227 + $0x78] sm:$0xff]
      %v254 = vld [vmem:[%s227 + $0x80] sm:$0xff]
      %v255 = vld [vmem:[%s227 + $0x88] sm:$0xff]
      %v256 = vld [vmem:[%s227 + $0x90] sm:$0xff]
      %v257 = vld [vmem:[%s227 + $0x98] sm:$0xff]
      %v258 = vld [vmem:[%s227 + $0xa0] sm:$0xff]
      %v259 = vld [vmem:[%s227 + $0xa8] sm:$0xff]
      %v260 = vld [vmem:[%s227 + $0xb0] sm:$0xff]
      %v261 = vld [vmem:[%s227 + $0xb8] sm:$0xff]
      %v262 = vld [vmem:[%s227 + $0xc0] sm:$0xff]
      %v263 = vld [vmem:[%s227 + $0xc8] sm:$0xff]
      %v264 = vld [vmem:[%s227 + $0xd0] sm:$0xff]
      %v265 = vld [vmem:[%s227 + $0xd8] sm:$0xff]
      %v266 = vld [vmem:[%s227 + $0xe0] sm:$0xff]
      %v267 = vld [vmem:[%s227 + $0xe8] sm:$0xff]
      %v268 = vld [vmem:[%s227 + $0xf0] sm:$0xff]
      %v269 = vld [vmem:[%s227 + $0xf8] sm:$0xff]
      %v270 = vld [vmem:[%s227 + $0x100] sm:$0xff]
      %v271 = vld [vmem:[%s227 + $0x108] sm:$0xff]
      %v272 = vld [vmem:[%s227 + $0x110] sm:$0xff]
      %v273 = vld [vmem:[%s227 + $0x118] sm:$0xff]
      %v274 = vld [vmem:[%s227 + $0x120] sm:$0xff]
      %v275 = vld [vmem:[%s227 + $0x128] sm:$0xff]
      %v276 = vld [vmem:[%s227 + $0x130] sm:$0xff]
      %v277 = vld [vmem:[%s227 + $0x138] sm:$0xff]
      %v278 = vld [vmem:[%s227 + $0x140] sm:$0xff]
      %v279 = vld [vmem:[%s227 + $0x148] sm:$0xff]
      %v280 = vld [vmem:[%s227 + $0x150] sm:$0xff]
      %v281 = vld [vmem:[%s227 + $0x158] sm:$0xff]
      %v282 = vld [vmem:[%s227 + $0x160] sm:$0xff]
      %v283 = vld [vmem:[%s227 + $0x168] sm:$0xff]
      %v284 = vld [vmem:[%s227 + $0x170] sm:$0xff]
      %v285 = vld [vmem:[%s227 + $0x178] sm:$0xff]
      %v286 = vld [vmem:[%s227 + $0x180] sm:$0xff]
      %v287 = vld [vmem:[%s227 + $0x188] sm:$0xff]
      %v288 = vld [vmem:[%s227 + $0x190] sm:$0xff]
      %v289 = vld [vmem:[%s227 + $0x198] sm:$0xff]
      %v290 = vld [vmem:[%s227 + $0x1a0] sm:$0xff]
      %v291 = vld [vmem:[%s227 + $0x1a8] sm:$0xff]
      %v292 = vld [vmem:[%s227 + $0x1b0] sm:$0xff]
      %v293 = vld [vmem:[%s227 + $0x1b8] sm:$0xff]
      %v294 = vld [vmem:[%s227 + $0x1c0] sm:$0xff]
      %v295 = vld [vmem:[%s227 + $0x1c8] sm:$0xff]
      %v296 = vld [vmem:[%s227 + $0x1d0] sm:$0xff]
      %v297 = vld [vmem:[%s227 + $0x1d8] sm:$0xff]
      %v298 = vld [vmem:[%s227 + $0x1e0] sm:$0xff]
      %v299 = vld [vmem:[%s227 + $0x1e8] sm:$0xff]
      %v300 = vld [vmem:[%s227 + $0x1f0] sm:$0xff]
      %v301 = vld [vmem:[%s227 + $0x1f8] sm:$0xff]
      %vm302 = vcmask 261120
      %v303 = vsel %vm302, %v238, 0.0
      %v304 = vsel %vm302, %v246, 0.0
      %v305 = vadd.f32 %v303, %v304
      %v306 = vsel %vm302, %v254, 0.0
      %v307 = vadd.f32 %v305, %v306
      %v308 = vsel %vm302, %v262, 0.0
      %v309 = vadd.f32 %v307, %v308
      %v310 = vsel %vm302, %v270, 0.0
      %v311 = vadd.f32 %v309, %v310
      %v312 = vsel %vm302, %v278, 0.0
      %v313 = vadd.f32 %v311, %v312
      %v314 = vsel %vm302, %v286, 0.0
      %v315 = vadd.f32 %v313, %v314
      %v316 = vsel %vm302, %v294, 0.0
      %v317 = vadd.f32 %v315, %v316
      %v318 = vsel %vm302, %v239, 0.0
      %v319 = vsel %vm302, %v247, 0.0
      %v320 = vadd.f32 %v318, %v319
      %v321 = vsel %vm302, %v255, 0.0
      %v322 = vadd.f32 %v320, %v321
      %v323 = vsel %vm302, %v263, 0.0
      %v324 = vadd.f32 %v322, %v323
      %v325 = vsel %vm302, %v271, 0.0
      %v326 = vadd.f32 %v324, %v325
      %v327 = vsel %vm302, %v279, 0.0
      %v328 = vadd.f32 %v326, %v327
      %v329 = vsel %vm302, %v287, 0.0
      %v330 = vadd.f32 %v328, %v329
      %v331 = vsel %vm302, %v295, 0.0
      %v332 = vadd.f32 %v330, %v331
      %v333 = vsel %vm302, %v240, 0.0
      %v334 = vsel %vm302, %v248, 0.0
      %v335 = vadd.f32 %v333, %v334
      %v336 = vsel %vm302, %v256, 0.0
      %v337 = vadd.f32 %v335, %v336
      %v338 = vsel %vm302, %v264, 0.0
      %v339 = vadd.f32 %v337, %v338
      %v340 = vsel %vm302, %v272, 0.0
      %v341 = vadd.f32 %v339, %v340
      %v342 = vsel %vm302, %v280, 0.0
      %v343 = vadd.f32 %v341, %v342
      %v344 = vsel %vm302, %v288, 0.0
      %v345 = vadd.f32 %v343, %v344
      %v346 = vsel %vm302, %v296, 0.0
      %v347 = vadd.f32 %v345, %v346
      %v348 = vsel %vm302, %v241, 0.0
      %v349 = vsel %vm302, %v249, 0.0
      %v350 = vadd.f32 %v348, %v349
      %v351 = vsel %vm302, %v257, 0.0
      %v352 = vadd.f32 %v350, %v351
      %v353 = vsel %vm302, %v265, 0.0
      %v354 = vadd.f32 %v352, %v353
      %v355 = vsel %vm302, %v273, 0.0
      %v356 = vadd.f32 %v354, %v355
      %v357 = vsel %vm302, %v281, 0.0
      %v358 = vadd.f32 %v356, %v357
      %v359 = vsel %vm302, %v289, 0.0
      %v360 = vadd.f32 %v358, %v359
      %v361 = vsel %vm302, %v297, 0.0
      %v362 = vadd.f32 %v360, %v361
      %v363 = vsel %vm302, %v242, 0.0
      %v364 = vsel %vm302, %v250, 0.0
      %v365 = vadd.f32 %v363, %v364
      %v366 = vsel %vm302, %v258, 0.0
      %v367 = vadd.f32 %v365, %v366
      %v368 = vsel %vm302, %v266, 0.0
      %v369 = vadd.f32 %v367, %v368
      %v370 = vsel %vm302, %v274, 0.0
      %v371 = vadd.f32 %v369, %v370
      %v372 = vsel %vm302, %v282, 0.0
      %v373 = vadd.f32 %v371, %v372
      %v374 = vsel %vm302, %v290, 0.0
      %v375 = vadd.f32 %v373, %v374
      %v376 = vsel %vm302, %v298, 0.0
      %v377 = vadd.f32 %v375, %v376
      %v378 = vsel %vm302, %v243, 0.0
      %v379 = vsel %vm302, %v251, 0.0
      %v380 = vadd.f32 %v378, %v379
      %v381 = vsel %vm302, %v259, 0.0
      %v382 = vadd.f32 %v380, %v381
      %v383 = vsel %vm302, %v267, 0.0
      %v384 = vadd.f32 %v382, %v383
      %v385 = vsel %vm302, %v275, 0.0
      %v386 = vadd.f32 %v384, %v385
      %v387 = vsel %vm302, %v283, 0.0
      %v388 = vadd.f32 %v386, %v387
      %v389 = vsel %vm302, %v291, 0.0
      %v390 = vadd.f32 %v388, %v389
      %v391 = vsel %vm302, %v299, 0.0
      %v392 = vadd.f32 %v390, %v391
      %v393 = vsel %vm302, %v244, 0.0
      %v394 = vsel %vm302, %v252, 0.0
      %v395 = vadd.f32 %v393, %v394
      %v396 = vsel %vm302, %v260, 0.0
      %v397 = vadd.f32 %v395, %v396
      %v398 = vsel %vm302, %v268, 0.0
      %v399 = vadd.f32 %v397, %v398
      %v400 = vsel %vm302, %v276, 0.0
      %v401 = vadd.f32 %v399, %v400
      %v402 = vsel %vm302, %v284, 0.0
      %v403 = vadd.f32 %v401, %v402
      %v404 = vsel %vm302, %v292, 0.0
      %v405 = vadd.f32 %v403, %v404
      %v406 = vsel %vm302, %v300, 0.0
      %v407 = vadd.f32 %v405, %v406
      %v408 = vsel %vm302, %v245, 0.0
      %v409 = vsel %vm302, %v253, 0.0
      %v410 = vadd.f32 %v408, %v409
      %v411 = vsel %vm302, %v261, 0.0
      %v412 = vadd.f32 %v410, %v411
      %v413 = vsel %vm302, %v269, 0.0
      %v414 = vadd.f32 %v412, %v413
      %v415 = vsel %vm302, %v277, 0.0
      %v416 = vadd.f32 %v414, %v415
      %v417 = vsel %vm302, %v285, 0.0
      %v418 = vadd.f32 %v416, %v417
      %v419 = vsel %vm302, %v293, 0.0
      %v420 = vadd.f32 %v418, %v419
      %v421 = vsel %vm302, %v301, 0.0
      %v422 = vadd.f32 %v420, %v421
      %v423 = vsel %vm302, %v317, 0.0
      %v424 = vsel %vm302, %v332, 0.0
      %v425 = vadd.f32 %v423, %v424
      %v426 = vsel %vm302, %v347, 0.0
      %v427 = vadd.f32 %v425, %v426
      %v428 = vsel %vm302, %v362, 0.0
      %v429 = vadd.f32 %v427, %v428
      %v430 = vsel %vm302, %v377, 0.0
      %v431 = vadd.f32 %v429, %v430
      %v432 = vsel %vm302, %v392, 0.0
      %v433 = vadd.f32 %v431, %v432
      %v434 = vsel %vm302, %v407, 0.0
      %v435 = vadd.f32 %v433, %v434
      %v436 = vsel %vm302, %v422, 0.0
      %v437 = vadd.f32 %v435, %v436
      %v438 = vrot.slane %v437, 4
      %v439 = vadd.f32 %v437, %v438
      %v440 = vrot.slane %v439, 2
      %v441 = vadd.f32 %v439, %v440
      %v442 = vrot.slane %v441, 1
      %v443 = vadd.f32 %v441, %v442
      %v444 = vmul.f32 %v238, %v238
      %v445 = vmul.f32 %v239, %v239
      %v446 = vmul.f32 %v240, %v240
      %v447 = vmul.f32 %v241, %v241
      %v448 = vmul.f32 %v242, %v242
      %v449 = vmul.f32 %v243, %v243
      %v450 = vmul.f32 %v244, %v244
      %v451 = vmul.f32 %v245, %v245
      %v452 = vmul.f32 %v246, %v246
      %v453 = vmul.f32 %v247, %v247
      %v454 = vmul.f32 %v248, %v248
      %v455 = vmul.f32 %v249, %v249
      %v456 = vmul.f32 %v250, %v250
      %v457 = vmul.f32 %v251, %v251
      %v458 = vmul.f32 %v252, %v252
      %v459 = vmul.f32 %v253, %v253
      %v460 = vmul.f32 %v254, %v254
      %v461 = vmul.f32 %v255, %v255
      %v462 = vmul.f32 %v256, %v256
      %v463 = vmul.f32 %v257, %v257
      %v464 = vmul.f32 %v258, %v258
      %v465 = vmul.f32 %v259, %v259
      %v466 = vmul.f32 %v260, %v260
      %v467 = vmul.f32 %v261, %v261
      %v468 = vmul.f32 %v262, %v262
      %v469 = vmul.f32 %v263, %v263
      %v470 = vmul.f32 %v264, %v264
      %v471 = vmul.f32 %v265, %v265
      %v472 = vmul.f32 %v266, %v266
      %v473 = vmul.f32 %v267, %v267
      %v474 = vmul.f32 %v268, %v268
      %v475 = vmul.f32 %v269, %v269
      %v476 = vmul.f32 %v270, %v270
      %v477 = vmul.f32 %v271, %v271
      %v478 = vmul.f32 %v272, %v272
      %v479 = vmul.f32 %v273, %v273
      %v480 = vmul.f32 %v274, %v274
      %v481 = vmul.f32 %v275, %v275
      %v482 = vmul.f32 %v276, %v276
      %v483 = vmul.f32 %v277, %v277
      %v484 = vmul.f32 %v278, %v278
      %v485 = vmul.f32 %v279, %v279
      %v486 = vmul.f32 %v280, %v280
      %v487 = vmul.f32 %v281, %v281
      %v488 = vmul.f32 %v282, %v282
      %v489 = vmul.f32 %v283, %v283
      %v490 = vmul.f32 %v284, %v284
      %v491 = vmul.f32 %v285, %v285
      %v492 = vmul.f32 %v286, %v286
      %v493 = vmul.f32 %v287, %v287
      %v494 = vmul.f32 %v288, %v288
      %v495 = vmul.f32 %v289, %v289
      %v496 = vmul.f32 %v290, %v290
      %v497 = vmul.f32 %v291, %v291
      %v498 = vmul.f32 %v292, %v292
      %v499 = vmul.f32 %v293, %v293
      %v500 = vmul.f32 %v294, %v294
      %v501 = vmul.f32 %v295, %v295
      %v502 = vmul.f32 %v296, %v296
      %v503 = vmul.f32 %v297, %v297
      %v504 = vmul.f32 %v298, %v298
      %v505 = vmul.f32 %v299, %v299
      %v506 = vmul.f32 %v300, %v300
      %v507 = vmul.f32 %v301, %v301
      %v508 = vsel %vm302, %v444, 0.0
      %v509 = vsel %vm302, %v452, 0.0
      %v510 = vadd.f32 %v508, %v509
      %v511 = vsel %vm302, %v460, 0.0
      %v512 = vadd.f32 %v510, %v511
      %v513 = vsel %vm302, %v468, 0.0
      %v514 = vadd.f32 %v512, %v513
      %v515 = vsel %vm302, %v476, 0.0
      %v516 = vadd.f32 %v514, %v515
      %v517 = vsel %vm302, %v484, 0.0
      %v518 = vadd.f32 %v516, %v517
      %v519 = vsel %vm302, %v492, 0.0
      %v520 = vadd.f32 %v518, %v519
      %v521 = vsel %vm302, %v500, 0.0
      %v522 = vadd.f32 %v520, %v521
      %v523 = vsel %vm302, %v445, 0.0
      %v524 = vsel %vm302, %v453, 0.0
      %v525 = vadd.f32 %v523, %v524
      %v526 = vsel %vm302, %v461, 0.0
      %v527 = vadd.f32 %v525, %v526
      %v528 = vsel %vm302, %v469, 0.0
      %v529 = vadd.f32 %v527, %v528
      %v530 = vsel %vm302, %v477, 0.0
      %v531 = vadd.f32 %v529, %v530
      %v532 = vsel %vm302, %v485, 0.0
      %v533 = vadd.f32 %v531, %v532
      %v534 = vsel %vm302, %v493, 0.0
      %v535 = vadd.f32 %v533, %v534
      %v536 = vsel %vm302, %v501, 0.0
      %v537 = vadd.f32 %v535, %v536
      %v538 = vsel %vm302, %v446, 0.0
      %v539 = vsel %vm302, %v454, 0.0
      %v540 = vadd.f32 %v538, %v539
      %v541 = vsel %vm302, %v462, 0.0
      %v542 = vadd.f32 %v540, %v541
      %v543 = vsel %vm302, %v470, 0.0
      %v544 = vadd.f32 %v542, %v543
      %v545 = vsel %vm302, %v478, 0.0
      %v546 = vadd.f32 %v544, %v545
      %v547 = vsel %vm302, %v486, 0.0
      %v548 = vadd.f32 %v546, %v547
      %v549 = vsel %vm302, %v494, 0.0
      %v550 = vadd.f32 %v548, %v549
      %v551 = vsel %vm302, %v502, 0.0
      %v552 = vadd.f32 %v550, %v551
      %v553 = vsel %vm302, %v447, 0.0
      %v554 = vsel %vm302, %v455, 0.0
      %v555 = vadd.f32 %v553, %v554
      %v556 = vsel %vm302, %v463, 0.0
      %v557 = vadd.f32 %v555, %v556
      %v558 = vsel %vm302, %v471, 0.0
      %v559 = vadd.f32 %v557, %v558
      %v560 = vsel %vm302, %v479, 0.0
      %v561 = vadd.f32 %v559, %v560
      %v562 = vsel %vm302, %v487, 0.0
      %v563 = vadd.f32 %v561, %v562
      %v564 = vsel %vm302, %v495, 0.0
      %v565 = vadd.f32 %v563, %v564
      %v566 = vsel %vm302, %v503, 0.0
      %v567 = vadd.f32 %v565, %v566
      %v568 = vsel %vm302, %v448, 0.0
      %v569 = vsel %vm302, %v456, 0.0
      %v570 = vadd.f32 %v568, %v569
      %v571 = vsel %vm302, %v464, 0.0
      %v572 = vadd.f32 %v570, %v571
      %v573 = vsel %vm302, %v472, 0.0
      %v574 = vadd.f32 %v572, %v573
      %v575 = vsel %vm302, %v480, 0.0
      %v576 = vadd.f32 %v574, %v575
      %v577 = vsel %vm302, %v488, 0.0
      %v578 = vadd.f32 %v576, %v577
      %v579 = vsel %vm302, %v496, 0.0
      %v580 = vadd.f32 %v578, %v579
      %v581 = vsel %vm302, %v504, 0.0
      %v582 = vadd.f32 %v580, %v581
      %v583 = vsel %vm302, %v449, 0.0
      %v584 = vsel %vm302, %v457, 0.0
      %v585 = vadd.f32 %v583, %v584
      %v586 = vsel %vm302, %v465, 0.0
      %v587 = vadd.f32 %v585, %v586
      %v588 = vsel %vm302, %v473, 0.0
      %v589 = vadd.f32 %v587, %v588
      %v590 = vsel %vm302, %v481, 0.0
      %v591 = vadd.f32 %v589, %v590
      %v592 = vsel %vm302, %v489, 0.0
      %v593 = vadd.f32 %v591, %v592
      %v594 = vsel %vm302, %v497, 0.0
      %v595 = vadd.f32 %v593, %v594
      %v596 = vsel %vm302, %v505, 0.0
      %v597 = vadd.f32 %v595, %v596
      %v598 = vsel %vm302, %v450, 0.0
      %v599 = vsel %vm302, %v458, 0.0
      %v600 = vadd.f32 %v598, %v599
      %v601 = vsel %vm302, %v466, 0.0
      %v602 = vadd.f32 %v600, %v601
      %v603 = vsel %vm302, %v474, 0.0
      %v604 = vadd.f32 %v602, %v603
      %v605 = vsel %vm302, %v482, 0.0
      %v606 = vadd.f32 %v604, %v605
      %v607 = vsel %vm302, %v490, 0.0
      %v608 = vadd.f32 %v606, %v607
      %v609 = vsel %vm302, %v498, 0.0
      %v610 = vadd.f32 %v608, %v609
      %v611 = vsel %vm302, %v506, 0.0
      %v612 = vadd.f32 %v610, %v611
      %v613 = vsel %vm302, %v451, 0.0
      %v614 = vsel %vm302, %v459, 0.0
      %v615 = vadd.f32 %v613, %v614
      %v616 = vsel %vm302, %v467, 0.0
      %v617 = vadd.f32 %v615, %v616
      %v618 = vsel %vm302, %v475, 0.0
      %v619 = vadd.f32 %v617, %v618
      %v620 = vsel %vm302, %v483, 0.0
      %v621 = vadd.f32 %v619, %v620
      %v622 = vsel %vm302, %v491, 0.0
      %v623 = vadd.f32 %v621, %v622
      %v624 = vsel %vm302, %v499, 0.0
      %v625 = vadd.f32 %v623, %v624
      %v626 = vsel %vm302, %v507, 0.0
      %v627 = vadd.f32 %v625, %v626
      %v628 = vsel %vm302, %v522, 0.0
      %v629 = vsel %vm302, %v537, 0.0
      %v630 = vadd.f32 %v628, %v629
      %v631 = vsel %vm302, %v552, 0.0
      %v632 = vadd.f32 %v630, %v631
      %v633 = vsel %vm302, %v567, 0.0
      %v634 = vadd.f32 %v632, %v633
      %v635 = vsel %vm302, %v582, 0.0
      %v636 = vadd.f32 %v634, %v635
      %v637 = vsel %vm302, %v597, 0.0
      %v638 = vadd.f32 %v636, %v637
      %v639 = vsel %vm302, %v612, 0.0
      %v640 = vadd.f32 %v638, %v639
      %v641 = vsel %vm302, %v627, 0.0
      %v642 = vadd.f32 %v640, %v641
      %v643 = vrot.slane %v642, 4
      %v644 = vadd.f32 %v642, %v643
      %v645 = vrot.slane %v644, 2
      %v646 = vadd.f32 %v644, %v645
      %v647 = vrot.slane %v646, 1
      %v648 = vadd.f32 %v646, %v647
      %v649 = vld [vmem:[%s3] sm:$0xff]
      %v650 = vld [vmem:[%s3 + $0x8] sm:$0xff]
      %v651 = vld [vmem:[%s3 + $0x10] sm:$0xff]
      %v652 = vld [vmem:[%s3 + $0x18] sm:$0xff]
      %v654 = vsel %vm302, %v443, 0
      %656 = vmatpush.msra.mxu0 0.0
      %657 = vmatpush.msra.mxu0 0.0
      %658 = vmatpush.msra.mxu0 0.0
      %659 = vmatpush.msra.mxu0 0.0
      %660 = vmatpush.msra.mxu0 0.0
      %661 = vmatpush.msra.mxu0 0.0
      %662 = vmatpush.msra.mxu0 0.0
      %663 = vmatpush.msra.mxu0 0.0
      %664 = vmatpush.msra.mxu0 0.0
      %665 = vmatpush.msra.mxu0 0.0
      %666 = vmatpush.msra.mxu0 0.0
      %667 = vmatpush.msra.mxu0 0.0
      %668 = vmatpush.msra.mxu0 %v652
      %669 = vmatpush.msra.mxu0 %v651
      %670 = vmatpush.msra.mxu0 %v650
      %671 = vmatpush.msra.mxu0 %v649
      %672 = vmatmul.f32.gmra.mxu0 %v654
      %v673 = vpop.f32.mrf.mxu0
      %v674 = vadd.f32 0.0, %v673
      %675 = vdwg.mxu0
      %v677 = vsel %vm302, %v648, 0
      %679 = vmatpush.msra.mxu0 0.0
      %680 = vmatpush.msra.mxu0 0.0
      %681 = vmatpush.msra.mxu0 0.0
      %682 = vmatpush.msra.mxu0 0.0
      %683 = vmatpush.msra.mxu0 0.0
      %684 = vmatpush.msra.mxu0 0.0
      %685 = vmatpush.msra.mxu0 0.0
      %686 = vmatpush.msra.mxu0 0.0
      %687 = vmatpush.msra.mxu0 0.0
      %688 = vmatpush.msra.mxu0 0.0
      %689 = vmatpush.msra.mxu0 0.0
      %690 = vmatpush.msra.mxu0 0.0
      %691 = vmatpush.msra.mxu0 %v652
      %692 = vmatpush.msra.mxu0 %v651
      %693 = vmatpush.msra.mxu0 %v650
      %694 = vmatpush.msra.mxu0 %v649
      %695 = vmatmul.f32.gmra.mxu0 %v677
      %v696 = vpop.f32.mrf.mxu0
      %v697 = vadd.f32 0.0, %v696
      %698 = vdwg.mxu0
      %v699 = vmul.f32 %v674, %v674
      %v700 = vsub.f32 %v697, %v699
      %v701 = vld [vmem:[%s1] sm:$0x1]
      %v702 = vadd.f32 %v700, 1e-05
      %v703 = vrsqrt.pop %v702
      %v704 = vmul.f32 %v703, %v702
      %v705 = vmul.f32 %v704, %v703
      %v706 = vmul.f32 0.5, %v705
      %v707 = vsub.f32 1.5, %v706
      %v708 = vmul.f32 %v703, %v707
      %vm709 = vweird.f32 %v702
      %vm710 = vweird.f32 %v703
      %vm711 = vmor %vm709, %vm710
      %v712 = vsel %vm711, %v703, %v708
      %v713 = vmul.f32 %v701, %v712
      %v714 = vld [vmem:[%s2] sm:$0x1]
      %v715 = vmul.f32 %v674, %v713
      %v716 = vsub.f32 %v714, %v715
      %v718 = vperm.slane %v713, 0
      %v720 = vmul.f32 %v238, %v718
      %v721 = vmul.f32 %v239, %v718
      %v722 = vmul.f32 %v240, %v718
      %v723 = vmul.f32 %v241, %v718
      %v724 = vmul.f32 %v242, %v718
      %v725 = vmul.f32 %v243, %v718
      %v726 = vmul.f32 %v244, %v718
      %v727 = vmul.f32 %v245, %v718
      %v728 = vmul.f32 %v246, %v718
      %v729 = vmul.f32 %v247, %v718
      %v730 = vmul.f32 %v248, %v718
      %v731 = vmul.f32 %v249, %v718
      %v732 = vmul.f32 %v250, %v718
      %v733 = vmul.f32 %v251, %v718
      %v734 = vmul.f32 %v252, %v718
      %v735 = vmul.f32 %v253, %v718
      %v736 = vmul.f32 %v254, %v718
      %v737 = vmul.f32 %v255, %v718
      %v738 = vmul.f32 %v256, %v718
      %v739 = vmul.f32 %v257, %v718
      %v740 = vmul.f32 %v258, %v718
      %v741 = vmul.f32 %v259, %v718
      %v742 = vmul.f32 %v260, %v718
      %v743 = vmul.f32 %v261, %v718
      %v744 = vmul.f32 %v262, %v718
      %v745 = vmul.f32 %v263, %v718
      %v746 = vmul.f32 %v264, %v718
      %v747 = vmul.f32 %v265, %v718
      %v748 = vmul.f32 %v266, %v718
      %v749 = vmul.f32 %v267, %v718
      %v750 = vmul.f32 %v268, %v718
      %v751 = vmul.f32 %v269, %v718
      %v752 = vmul.f32 %v270, %v718
      %v753 = vmul.f32 %v271, %v718
      %v754 = vmul.f32 %v272, %v718
      %v755 = vmul.f32 %v273, %v718
      %v756 = vmul.f32 %v274, %v718
      %v757 = vmul.f32 %v275, %v718
      %v758 = vmul.f32 %v276, %v718
      %v759 = vmul.f32 %v277, %v718
      %v760 = vmul.f32 %v278, %v718
      %v761 = vmul.f32 %v279, %v718
      %v762 = vmul.f32 %v280, %v718
      %v763 = vmul.f32 %v281, %v718
      %v764 = vmul.f32 %v282, %v718
      %v765 = vmul.f32 %v283, %v718
      %v766 = vmul.f32 %v284, %v718
      %v767 = vmul.f32 %v285, %v718
      %v768 = vmul.f32 %v286, %v718
      %v769 = vmul.f32 %v287, %v718
      %v770 = vmul.f32 %v288, %v718
      %v771 = vmul.f32 %v289, %v718
      %v772 = vmul.f32 %v290, %v718
      %v773 = vmul.f32 %v291, %v718
      %v774 = vmul.f32 %v292, %v718
      %v775 = vmul.f32 %v293, %v718
      %v776 = vmul.f32 %v294, %v718
      %v777 = vmul.f32 %v295, %v718
      %v778 = vmul.f32 %v296, %v718
      %v779 = vmul.f32 %v297, %v718
      %v780 = vmul.f32 %v298, %v718
      %v781 = vmul.f32 %v299, %v718
      %v782 = vmul.f32 %v300, %v718
      %v783 = vmul.f32 %v301, %v718
      %v785 = vperm.slane %v716, 0
      %v787 = vadd.f32 %v720, %v785
      %v788 = vadd.f32 %v721, %v785
      %v789 = vadd.f32 %v722, %v785
      %v790 = vadd.f32 %v723, %v785
      %v791 = vadd.f32 %v724, %v785
      %v792 = vadd.f32 %v725, %v785
      %v793 = vadd.f32 %v726, %v785
      %v794 = vadd.f32 %v727, %v785
      %v795 = vadd.f32 %v728, %v785
      %v796 = vadd.f32 %v729, %v785
      %v797 = vadd.f32 %v730, %v785
      %v798 = vadd.f32 %v731, %v785
      %v799 = vadd.f32 %v732, %v785
      %v800 = vadd.f32 %v733, %v785
      %v801 = vadd.f32 %v734, %v785
      %v802 = vadd.f32 %v735, %v785
      %v803 = vadd.f32 %v736, %v785
      %v804 = vadd.f32 %v737, %v785
      %v805 = vadd.f32 %v738, %v785
      %v806 = vadd.f32 %v739, %v785
      %v807 = vadd.f32 %v740, %v785
      %v808 = vadd.f32 %v741, %v785
      %v809 = vadd.f32 %v742, %v785
      %v810 = vadd.f32 %v743, %v785
      %v811 = vadd.f32 %v744, %v785
      %v812 = vadd.f32 %v745, %v785
      %v813 = vadd.f32 %v746, %v785
      %v814 = vadd.f32 %v747, %v785
      %v815 = vadd.f32 %v748, %v785
      %v816 = vadd.f32 %v749, %v785
      %v817 = vadd.f32 %v750, %v785
      %v818 = vadd.f32 %v751, %v785
      %v819 = vadd.f32 %v752, %v785
      %v820 = vadd.f32 %v753, %v785
      %v821 = vadd.f32 %v754, %v785
      %v822 = vadd.f32 %v755, %v785
      %v823 = vadd.f32 %v756, %v785
      %v824 = vadd.f32 %v757, %v785
      %v825 = vadd.f32 %v758, %v785
      %v826 = vadd.f32 %v759, %v785
      %v827 = vadd.f32 %v760, %v785
      %v828 = vadd.f32 %v761, %v785
      %v829 = vadd.f32 %v762, %v785
      %v830 = vadd.f32 %v763, %v785
      %v831 = vadd.f32 %v764, %v785
      %v832 = vadd.f32 %v765, %v785
      %v833 = vadd.f32 %v766, %v785
      %v834 = vadd.f32 %v767, %v785
      %v835 = vadd.f32 %v768, %v785
      %v836 = vadd.f32 %v769, %v785
      %v837 = vadd.f32 %v770, %v785
      %v838 = vadd.f32 %v771, %v785
      %v839 = vadd.f32 %v772, %v785
      %v840 = vadd.f32 %v773, %v785
      %v841 = vadd.f32 %v774, %v785
      %v842 = vadd.f32 %v775, %v785
      %v843 = vadd.f32 %v776, %v785
      %v844 = vadd.f32 %v777, %v785
      %v845 = vadd.f32 %v778, %v785
      %v846 = vadd.f32 %v779, %v785
      %v847 = vadd.f32 %v780, %v785
      %v848 = vadd.f32 %v781, %v785
      %v849 = vadd.f32 %v782, %v785
      %v850 = vadd.f32 %v783, %v785
      %v851 = vxor.u32 %v787, 2147483648
      %v852 = vxor.u32 %v788, 2147483648
      %v853 = vxor.u32 %v789, 2147483648
      %v854 = vxor.u32 %v790, 2147483648
      %v855 = vxor.u32 %v791, 2147483648
      %v856 = vxor.u32 %v792, 2147483648
      %v857 = vxor.u32 %v793, 2147483648
      %v858 = vxor.u32 %v794, 2147483648
      %v859 = vxor.u32 %v795, 2147483648
      %v860 = vxor.u32 %v796, 2147483648
      %v861 = vxor.u32 %v797, 2147483648
      %v862 = vxor.u32 %v798, 2147483648
      %v863 = vxor.u32 %v799, 2147483648
      %v864 = vxor.u32 %v800, 2147483648
      %v865 = vxor.u32 %v801, 2147483648
      %v866 = vxor.u32 %v802, 2147483648
      %v867 = vxor.u32 %v803, 2147483648
      %v868 = vxor.u32 %v804, 2147483648
      %v869 = vxor.u32 %v805, 2147483648
      %v870 = vxor.u32 %v806, 2147483648
      %v871 = vxor.u32 %v807, 2147483648
      %v872 = vxor.u32 %v808, 2147483648
      %v873 = vxor.u32 %v809, 2147483648
      %v874 = vxor.u32 %v810, 2147483648
      %v875 = vxor.u32 %v811, 2147483648
      %v876 = vxor.u32 %v812, 2147483648
      %v877 = vxor.u32 %v813, 2147483648
      %v878 = vxor.u32 %v814, 2147483648
      %v879 = vxor.u32 %v815, 2147483648
      %v880 = vxor.u32 %v816, 2147483648
      %v881 = vxor.u32 %v817, 2147483648
      %v882 = vxor.u32 %v818, 2147483648
      %v883 = vxor.u32 %v819, 2147483648
      %v884 = vxor.u32 %v820, 2147483648
      %v885 = vxor.u32 %v821, 2147483648
      %v886 = vxor.u32 %v822, 2147483648
      %v887 = vxor.u32 %v823, 2147483648
      %v888 = vxor.u32 %v824, 2147483648
      %v889 = vxor.u32 %v825, 2147483648
      %v890 = vxor.u32 %v826, 2147483648
      %v891 = vxor.u32 %v827, 2147483648
      %v892 = vxor.u32 %v828, 2147483648
      %v893 = vxor.u32 %v829, 2147483648
      %v894 = vxor.u32 %v830, 2147483648
      %v895 = vxor.u32 %v831, 2147483648
      %v896 = vxor.u32 %v832, 2147483648
      %v897 = vxor.u32 %v833, 2147483648
      %v898 = vxor.u32 %v834, 2147483648
      %v899 = vxor.u32 %v835, 2147483648
      %v900 = vxor.u32 %v836, 2147483648
      %v901 = vxor.u32 %v837, 2147483648
      %v902 = vxor.u32 %v838, 2147483648
      %v903 = vxor.u32 %v839, 2147483648
      %v904 = vxor.u32 %v840, 2147483648
      %v905 = vxor.u32 %v841, 2147483648
      %v906 = vxor.u32 %v842, 2147483648
      %v907 = vxor.u32 %v843, 2147483648
      %v908 = vxor.u32 %v844, 2147483648
      %v909 = vxor.u32 %v845, 2147483648
      %v910 = vxor.u32 %v846, 2147483648
      %v911 = vxor.u32 %v847, 2147483648
      %v912 = vxor.u32 %v848, 2147483648
      %v913 = vxor.u32 %v849, 2147483648
      %v914 = vxor.u32 %v850, 2147483648
      %v915 = vmul.f32 %v851, 1.442695
      %v916 = vpow.pop %v915
      %v917 = vmul.f32 %v852, 1.442695
      %v918 = vpow.pop %v917
      %v919 = vmul.f32 %v853, 1.442695
      %v920 = vpow.pop %v919
      %v921 = vmul.f32 %v854, 1.442695
      %v922 = vpow.pop %v921
      %v923 = vmul.f32 %v855, 1.442695
      %v924 = vpow.pop %v923
      %v925 = vmul.f32 %v856, 1.442695
      %v926 = vpow.pop %v925
      %v927 = vmul.f32 %v857, 1.442695
      %v928 = vpow.pop %v927
      %v929 = vmul.f32 %v858, 1.442695
      %v930 = vpow.pop %v929
      %v931 = vmul.f32 %v859, 1.442695
      %v932 = vpow.pop %v931
      %v933 = vmul.f32 %v860, 1.442695
      %v934 = vpow.pop %v933
      %v935 = vmul.f32 %v861, 1.442695
      %v936 = vpow.pop %v935
      %v937 = vmul.f32 %v862, 1.442695
      %v938 = vpow.pop %v937
      %v939 = vmul.f32 %v863, 1.442695
      %v940 = vpow.pop %v939
      %v941 = vmul.f32 %v864, 1.442695
      %v942 = vpow.pop %v941
      %v943 = vmul.f32 %v865, 1.442695
      %v944 = vpow.pop %v943
      %v945 = vmul.f32 %v866, 1.442695
      %v946 = vpow.pop %v945
      %v947 = vmul.f32 %v867, 1.442695
      %v948 = vpow.pop %v947
      %v949 = vmul.f32 %v868, 1.442695
      %v950 = vpow.pop %v949
      %v951 = vmul.f32 %v869, 1.442695
      %v952 = vpow.pop %v951
      %v953 = vmul.f32 %v870, 1.442695
      %v954 = vpow.pop %v953
      %v955 = vmul.f32 %v871, 1.442695
      %v956 = vpow.pop %v955
      %v957 = vmul.f32 %v872, 1.442695
      %v958 = vpow.pop %v957
      %v959 = vmul.f32 %v873, 1.442695
      %v960 = vpow.pop %v959
      %v961 = vmul.f32 %v874, 1.442695
      %v962 = vpow.pop %v961
      %v963 = vmul.f32 %v875, 1.442695
      %v964 = vpow.pop %v963
      %v965 = vmul.f32 %v876, 1.442695
      %v966 = vpow.pop %v965
      %v967 = vmul.f32 %v877, 1.442695
      %v968 = vpow.pop %v967
      %v969 = vmul.f32 %v878, 1.442695
      %v970 = vpow.pop %v969
      %v971 = vmul.f32 %v879, 1.442695
      %v972 = vpow.pop %v971
      %v973 = vmul.f32 %v880, 1.442695
      %v974 = vpow.pop %v973
      %v975 = vmul.f32 %v881, 1.442695
      %v976 = vpow.pop %v975
      %v977 = vmul.f32 %v882, 1.442695
      %v978 = vpow.pop %v977
      %v979 = vmul.f32 %v883, 1.442695
      %v980 = vpow.pop %v979
      %v981 = vmul.f32 %v884, 1.442695
      %v982 = vpow.pop %v981
      %v983 = vmul.f32 %v885, 1.442695
      %v984 = vpow.pop %v983
      %v985 = vmul.f32 %v886, 1.442695
      %v986 = vpow.pop %v985
      %v987 = vmul.f32 %v887, 1.442695
      %v988 = vpow.pop %v987
      %v989 = vmul.f32 %v888, 1.442695
      %v990 = vpow.pop %v989
      %v991 = vmul.f32 %v889, 1.442695
      %v992 = vpow.pop %v991
      %v993 = vmul.f32 %v890, 1.442695
      %v994 = vpow.pop %v993
      %v995 = vmul.f32 %v891, 1.442695
      %v996 = vpow.pop %v995
      %v997 = vmul.f32 %v892, 1.442695
      %v998 = vpow.pop %v997
      %v999 = vmul.f32 %v893, 1.442695
      %v1000 = vpow.pop %v999
      %v1001 = vmul.f32 %v894, 1.442695
      %v1002 = vpow.pop %v1001
      %v1003 = vmul.f32 %v895, 1.442695
      %v1004 = vpow.pop %v1003
      %v1005 = vmul.f32 %v896, 1.442695
      %v1006 = vpow.pop %v1005
      %v1007 = vmul.f32 %v897, 1.442695
      %v1008 = vpow.pop %v1007
      %v1009 = vmul.f32 %v898, 1.442695
      %v1010 = vpow.pop %v1009
      %v1011 = vmul.f32 %v899, 1.442695
      %v1012 = vpow.pop %v1011
      %v1013 = vmul.f32 %v900, 1.442695
      %v1014 = vpow.pop %v1013
      %v1015 = vmul.f32 %v901, 1.442695
      %v1016 = vpow.pop %v1015
      %v1017 = vmul.f32 %v902, 1.442695
      %v1018 = vpow.pop %v1017
      %v1019 = vmul.f32 %v903, 1.442695
      %v1020 = vpow.pop %v1019
      %v1021 = vmul.f32 %v904, 1.442695
      %v1022 = vpow.pop %v1021
      %v1023 = vmul.f32 %v905, 1.442695
      %v1024 = vpow.pop %v1023
      %v1025 = vmul.f32 %v906, 1.442695
      %v1026 = vpow.pop %v1025
      %v1027 = vmul.f32 %v907, 1.442695
      %v1028 = vpow.pop %v1027
      %v1029 = vmul.f32 %v908, 1.442695
      %v1030 = vpow.pop %v1029
      %v1031 = vmul.f32 %v909, 1.442695
      %v1032 = vpow.pop %v1031
      %v1033 = vmul.f32 %v910, 1.442695
      %v1034 = vpow.pop %v1033
      %v1035 = vmul.f32 %v911, 1.442695
      %v1036 = vpow.pop %v1035
      %v1037 = vmul.f32 %v912, 1.442695
      %v1038 = vpow.pop %v1037
      %v1039 = vmul.f32 %v913, 1.442695
      %v1040 = vpow.pop %v1039
      %v1041 = vmul.f32 %v914, 1.442695
      %v1042 = vpow.pop %v1041
      %v1043 = vadd.f32 %v916, 1.0
      %v1044 = vadd.f32 %v918, 1.0
      %v1045 = vadd.f32 %v920, 1.0
      %v1046 = vadd.f32 %v922, 1.0
      %v1047 = vadd.f32 %v924, 1.0
      %v1048 = vadd.f32 %v926, 1.0
      %v1049 = vadd.f32 %v928, 1.0
      %v1050 = vadd.f32 %v930, 1.0
      %v1051 = vadd.f32 %v932, 1.0
      %v1052 = vadd.f32 %v934, 1.0
      %v1053 = vadd.f32 %v936, 1.0
      %v1054 = vadd.f32 %v938, 1.0
      %v1055 = vadd.f32 %v940, 1.0
      %v1056 = vadd.f32 %v942, 1.0
      %v1057 = vadd.f32 %v944, 1.0
      %v1058 = vadd.f32 %v946, 1.0
      %v1059 = vadd.f32 %v948, 1.0
      %v1060 = vadd.f32 %v950, 1.0
      %v1061 = vadd.f32 %v952, 1.0
      %v1062 = vadd.f32 %v954, 1.0
      %v1063 = vadd.f32 %v956, 1.0
      %v1064 = vadd.f32 %v958, 1.0
      %v1065 = vadd.f32 %v960, 1.0
      %v1066 = vadd.f32 %v962, 1.0
      %v1067 = vadd.f32 %v964, 1.0
      %v1068 = vadd.f32 %v966, 1.0
      %v1069 = vadd.f32 %v968, 1.0
      %v1070 = vadd.f32 %v970, 1.0
      %v1071 = vadd.f32 %v972, 1.0
      %v1072 = vadd.f32 %v974, 1.0
      %v1073 = vadd.f32 %v976, 1.0
      %v1074 = vadd.f32 %v978, 1.0
      %v1075 = vadd.f32 %v980, 1.0
      %v1076 = vadd.f32 %v982, 1.0
      %v1077 = vadd.f32 %v984, 1.0
      %v1078 = vadd.f32 %v986, 1.0
      %v1079 = vadd.f32 %v988, 1.0
      %v1080 = vadd.f32 %v990, 1.0
      %v1081 = vadd.f32 %v992, 1.0
      %v1082 = vadd.f32 %v994, 1.0
      %v1083 = vadd.f32 %v996, 1.0
      %v1084 = vadd.f32 %v998, 1.0
      %v1085 = vadd.f32 %v1000, 1.0
      %v1086 = vadd.f32 %v1002, 1.0
      %v1087 = vadd.f32 %v1004, 1.0
      %v1088 = vadd.f32 %v1006, 1.0
      %v1089 = vadd.f32 %v1008, 1.0
      %v1090 = vadd.f32 %v1010, 1.0
      %v1091 = vadd.f32 %v1012, 1.0
      %v1092 = vadd.f32 %v1014, 1.0
      %v1093 = vadd.f32 %v1016, 1.0
      %v1094 = vadd.f32 %v1018, 1.0
      %v1095 = vadd.f32 %v1020, 1.0
      %v1096 = vadd.f32 %v1022, 1.0
      %v1097 = vadd.f32 %v1024, 1.0
      %v1098 = vadd.f32 %v1026, 1.0
      %v1099 = vadd.f32 %v1028, 1.0
      %v1100 = vadd.f32 %v1030, 1.0
      %v1101 = vadd.f32 %v1032, 1.0
      %v1102 = vadd.f32 %v1034, 1.0
      %v1103 = vadd.f32 %v1036, 1.0
      %v1104 = vadd.f32 %v1038, 1.0
      %v1105 = vadd.f32 %v1040, 1.0
      %v1106 = vadd.f32 %v1042, 1.0
      %v1107 = vrcp.pop %v1043
      %v1108 = vmul.f32 %v1043, %v1107
      %v1109 = vsub.f32 1.0, %v1108
      %v1110 = vmul.f32 %v1107, %v1109
      %v1111 = vadd.f32 %v1107, %v1110
      %vm1112 = vweird.f32 %v1043
      %vm1113 = vweird.f32 %v1107
      %vm1114 = vmor %vm1112, %vm1113
      %v1115 = vsel %vm1114, %v1107, %v1111
      %v1116 = vand.u32 2147483647, %v1043
      %vm1117 = vcmp.eq.f32.partialorder %v1116, 8.507059e+37
      %v1118 = vand.u32 %v1043, 2147483648
      %v1119 = vor.u32 1.1754944e-38, %v1118
      %v1120 = vsel %vm1117, %v1119, %v1115
      %v1121 = vmul.f32 1.0, %v1120
      %v1122 = vrcp.pop %v1044
      %v1123 = vmul.f32 %v1044, %v1122
      %v1124 = vsub.f32 1.0, %v1123
      %v1125 = vmul.f32 %v1122, %v1124
      %v1126 = vadd.f32 %v1122, %v1125
      %vm1127 = vweird.f32 %v1044
      %vm1128 = vweird.f32 %v1122
      %vm1129 = vmor %vm1127, %vm1128
      %v1130 = vsel %vm1129, %v1122, %v1126
      %v1131 = vand.u32 2147483647, %v1044
      %vm1132 = vcmp.eq.f32.partialorder %v1131, 8.507059e+37
      %v1133 = vand.u32 %v1044, 2147483648
      %v1134 = vor.u32 1.1754944e-38, %v1133
      %v1135 = vsel %vm1132, %v1134, %v1130
      %v1136 = vmul.f32 1.0, %v1135
      %v1137 = vrcp.pop %v1045
      %v1138 = vmul.f32 %v1045, %v1137
      %v1139 = vsub.f32 1.0, %v1138
      %v1140 = vmul.f32 %v1137, %v1139
      %v1141 = vadd.f32 %v1137, %v1140
      %vm1142 = vweird.f32 %v1045
      %vm1143 = vweird.f32 %v1137
      %vm1144 = vmor %vm1142, %vm1143
      %v1145 = vsel %vm1144, %v1137, %v1141
      %v1146 = vand.u32 2147483647, %v1045
      %vm1147 = vcmp.eq.f32.partialorder %v1146, 8.507059e+37
      %v1148 = vand.u32 %v1045, 2147483648
      %v1149 = vor.u32 1.1754944e-38, %v1148
      %v1150 = vsel %vm1147, %v1149, %v1145
      %v1151 = vmul.f32 1.0, %v1150
      %v1152 = vrcp.pop %v1046
      %v1153 = vmul.f32 %v1046, %v1152
      %v1154 = vsub.f32 1.0, %v1153
      %v1155 = vmul.f32 %v1152, %v1154
      %v1156 = vadd.f32 %v1152, %v1155
      %vm1157 = vweird.f32 %v1046
      %vm1158 = vweird.f32 %v1152
      %vm1159 = vmor %vm1157, %vm1158
      %v1160 = vsel %vm1159, %v1152, %v1156
      %v1161 = vand.u32 2147483647, %v1046
      %vm1162 = vcmp.eq.f32.partialorder %v1161, 8.507059e+37
      %v1163 = vand.u32 %v1046, 2147483648
      %v1164 = vor.u32 1.1754944e-38, %v1163
      %v1165 = vsel %vm1162, %v1164, %v1160
      %v1166 = vmul.f32 1.0, %v1165
      %v1167 = vrcp.pop %v1047
      %v1168 = vmul.f32 %v1047, %v1167
      %v1169 = vsub.f32 1.0, %v1168
      %v1170 = vmul.f32 %v1167, %v1169
      %v1171 = vadd.f32 %v1167, %v1170
      %vm1172 = vweird.f32 %v1047
      %vm1173 = vweird.f32 %v1167
      %vm1174 = vmor %vm1172, %vm1173
      %v1175 = vsel %vm1174, %v1167, %v1171
      %v1176 = vand.u32 2147483647, %v1047
      %vm1177 = vcmp.eq.f32.partialorder %v1176, 8.507059e+37
      %v1178 = vand.u32 %v1047, 2147483648
      %v1179 = vor.u32 1.1754944e-38, %v1178
      %v1180 = vsel %vm1177, %v1179, %v1175
      %v1181 = vmul.f32 1.0, %v1180
      %v1182 = vrcp.pop %v1048
      %v1183 = vmul.f32 %v1048, %v1182
      %v1184 = vsub.f32 1.0, %v1183
      %v1185 = vmul.f32 %v1182, %v1184
      %v1186 = vadd.f32 %v1182, %v1185
      %vm1187 = vweird.f32 %v1048
      %vm1188 = vweird.f32 %v1182
      %vm1189 = vmor %vm1187, %vm1188
      %v1190 = vsel %vm1189, %v1182, %v1186
      %v1191 = vand.u32 2147483647, %v1048
      %vm1192 = vcmp.eq.f32.partialorder %v1191, 8.507059e+37
      %v1193 = vand.u32 %v1048, 2147483648
      %v1194 = vor.u32 1.1754944e-38, %v1193
      %v1195 = vsel %vm1192, %v1194, %v1190
      %v1196 = vmul.f32 1.0, %v1195
      %v1197 = vrcp.pop %v1049
      %v1198 = vmul.f32 %v1049, %v1197
      %v1199 = vsub.f32 1.0, %v1198
      %v1200 = vmul.f32 %v1197, %v1199
      %v1201 = vadd.f32 %v1197, %v1200
      %vm1202 = vweird.f32 %v1049
      %vm1203 = vweird.f32 %v1197
      %vm1204 = vmor %vm1202, %vm1203
      %v1205 = vsel %vm1204, %v1197, %v1201
      %v1206 = vand.u32 2147483647, %v1049
      %vm1207 = vcmp.eq.f32.partialorder %v1206, 8.507059e+37
      %v1208 = vand.u32 %v1049, 2147483648
      %v1209 = vor.u32 1.1754944e-38, %v1208
      %v1210 = vsel %vm1207, %v1209, %v1205
      %v1211 = vmul.f32 1.0, %v1210
      %v1212 = vrcp.pop %v1050
      %v1213 = vmul.f32 %v1050, %v1212
      %v1214 = vsub.f32 1.0, %v1213
      %v1215 = vmul.f32 %v1212, %v1214
      %v1216 = vadd.f32 %v1212, %v1215
      %vm1217 = vweird.f32 %v1050
      %vm1218 = vweird.f32 %v1212
      %vm1219 = vmor %vm1217, %vm1218
      %v1220 = vsel %vm1219, %v1212, %v1216
      %v1221 = vand.u32 2147483647, %v1050
      %vm1222 = vcmp.eq.f32.partialorder %v1221, 8.507059e+37
      %v1223 = vand.u32 %v1050, 2147483648
      %v1224 = vor.u32 1.1754944e-38, %v1223
      %v1225 = vsel %vm1222, %v1224, %v1220
      %v1226 = vmul.f32 1.0, %v1225
      %v1227 = vrcp.pop %v1051
      %v1228 = vmul.f32 %v1051, %v1227
      %v1229 = vsub.f32 1.0, %v1228
      %v1230 = vmul.f32 %v1227, %v1229
      %v1231 = vadd.f32 %v1227, %v1230
      %vm1232 = vweird.f32 %v1051
      %vm1233 = vweird.f32 %v1227
      %vm1234 = vmor %vm1232, %vm1233
      %v1235 = vsel %vm1234, %v1227, %v1231
      %v1236 = vand.u32 2147483647, %v1051
      %vm1237 = vcmp.eq.f32.partialorder %v1236, 8.507059e+37
      %v1238 = vand.u32 %v1051, 2147483648
      %v1239 = vor.u32 1.1754944e-38, %v1238
      %v1240 = vsel %vm1237, %v1239, %v1235
      %v1241 = vmul.f32 1.0, %v1240
      %v1242 = vrcp.pop %v1052
      %v1243 = vmul.f32 %v1052, %v1242
      %v1244 = vsub.f32 1.0, %v1243
      %v1245 = vmul.f32 %v1242, %v1244
      %v1246 = vadd.f32 %v1242, %v1245
      %vm1247 = vweird.f32 %v1052
      %vm1248 = vweird.f32 %v1242
      %vm1249 = vmor %vm1247, %vm1248
      %v1250 = vsel %vm1249, %v1242, %v1246
      %v1251 = vand.u32 2147483647, %v1052
      %vm1252 = vcmp.eq.f32.partialorder %v1251, 8.507059e+37
      %v1253 = vand.u32 %v1052, 2147483648
      %v1254 = vor.u32 1.1754944e-38, %v1253
      %v1255 = vsel %vm1252, %v1254, %v1250
      %v1256 = vmul.f32 1.0, %v1255
      %v1257 = vrcp.pop %v1053
      %v1258 = vmul.f32 %v1053, %v1257
      %v1259 = vsub.f32 1.0, %v1258
      %v1260 = vmul.f32 %v1257, %v1259
      %v1261 = vadd.f32 %v1257, %v1260
      %vm1262 = vweird.f32 %v1053
      %vm1263 = vweird.f32 %v1257
      %vm1264 = vmor %vm1262, %vm1263
      %v1265 = vsel %vm1264, %v1257, %v1261
      %v1266 = vand.u32 2147483647, %v1053
      %vm1267 = vcmp.eq.f32.partialorder %v1266, 8.507059e+37
      %v1268 = vand.u32 %v1053, 2147483648
      %v1269 = vor.u32 1.1754944e-38, %v1268
      %v1270 = vsel %vm1267, %v1269, %v1265
      %v1271 = vmul.f32 1.0, %v1270
      %v1272 = vrcp.pop %v1054
      %v1273 = vmul.f32 %v1054, %v1272
      %v1274 = vsub.f32 1.0, %v1273
      %v1275 = vmul.f32 %v1272, %v1274
      %v1276 = vadd.f32 %v1272, %v1275
      %vm1277 = vweird.f32 %v1054
      %vm1278 = vweird.f32 %v1272
      %vm1279 = vmor %vm1277, %vm1278
      %v1280 = vsel %vm1279, %v1272, %v1276
      %v1281 = vand.u32 2147483647, %v1054
      %vm1282 = vcmp.eq.f32.partialorder %v1281, 8.507059e+37
      %v1283 = vand.u32 %v1054, 2147483648
      %v1284 = vor.u32 1.1754944e-38, %v1283
      %v1285 = vsel %vm1282, %v1284, %v1280
      %v1286 = vmul.f32 1.0, %v1285
      %v1287 = vrcp.pop %v1055
      %v1288 = vmul.f32 %v1055, %v1287
      %v1289 = vsub.f32 1.0, %v1288
      %v1290 = vmul.f32 %v1287, %v1289
      %v1291 = vadd.f32 %v1287, %v1290
      %vm1292 = vweird.f32 %v1055
      %vm1293 = vweird.f32 %v1287
      %vm1294 = vmor %vm1292, %vm1293
      %v1295 = vsel %vm1294, %v1287, %v1291
      %v1296 = vand.u32 2147483647, %v1055
      %vm1297 = vcmp.eq.f32.partialorder %v1296, 8.507059e+37
      %v1298 = vand.u32 %v1055, 2147483648
      %v1299 = vor.u32 1.1754944e-38, %v1298
      %v1300 = vsel %vm1297, %v1299, %v1295
      %v1301 = vmul.f32 1.0, %v1300
      %v1302 = vrcp.pop %v1056
      %v1303 = vmul.f32 %v1056, %v1302
      %v1304 = vsub.f32 1.0, %v1303
      %v1305 = vmul.f32 %v1302, %v1304
      %v1306 = vadd.f32 %v1302, %v1305
      %vm1307 = vweird.f32 %v1056
      %vm1308 = vweird.f32 %v1302
      %vm1309 = vmor %vm1307, %vm1308
      %v1310 = vsel %vm1309, %v1302, %v1306
      %v1311 = vand.u32 2147483647, %v1056
      %vm1312 = vcmp.eq.f32.partialorder %v1311, 8.507059e+37
      %v1313 = vand.u32 %v1056, 2147483648
      %v1314 = vor.u32 1.1754944e-38, %v1313
      %v1315 = vsel %vm1312, %v1314, %v1310
      %v1316 = vmul.f32 1.0, %v1315
      %v1317 = vrcp.pop %v1057
      %v1318 = vmul.f32 %v1057, %v1317
      %v1319 = vsub.f32 1.0, %v1318
      %v1320 = vmul.f32 %v1317, %v1319
      %v1321 = vadd.f32 %v1317, %v1320
      %vm1322 = vweird.f32 %v1057
      %vm1323 = vweird.f32 %v1317
      %vm1324 = vmor %vm1322, %vm1323
      %v1325 = vsel %vm1324, %v1317, %v1321
      %v1326 = vand.u32 2147483647, %v1057
      %vm1327 = vcmp.eq.f32.partialorder %v1326, 8.507059e+37
      %v1328 = vand.u32 %v1057, 2147483648
      %v1329 = vor.u32 1.1754944e-38, %v1328
      %v1330 = vsel %vm1327, %v1329, %v1325
      %v1331 = vmul.f32 1.0, %v1330
      %v1332 = vrcp.pop %v1058
      %v1333 = vmul.f32 %v1058, %v1332
      %v1334 = vsub.f32 1.0, %v1333
      %v1335 = vmul.f32 %v1332, %v1334
      %v1336 = vadd.f32 %v1332, %v1335
      %vm1337 = vweird.f32 %v1058
      %vm1338 = vweird.f32 %v1332
      %vm1339 = vmor %vm1337, %vm1338
      %v1340 = vsel %vm1339, %v1332, %v1336
      %v1341 = vand.u32 2147483647, %v1058
      %vm1342 = vcmp.eq.f32.partialorder %v1341, 8.507059e+37
      %v1343 = vand.u32 %v1058, 2147483648
      %v1344 = vor.u32 1.1754944e-38, %v1343
      %v1345 = vsel %vm1342, %v1344, %v1340
      %v1346 = vmul.f32 1.0, %v1345
      %v1347 = vrcp.pop %v1059
      %v1348 = vmul.f32 %v1059, %v1347
      %v1349 = vsub.f32 1.0, %v1348
      %v1350 = vmul.f32 %v1347, %v1349
      %v1351 = vadd.f32 %v1347, %v1350
      %vm1352 = vweird.f32 %v1059
      %vm1353 = vweird.f32 %v1347
      %vm1354 = vmor %vm1352, %vm1353
      %v1355 = vsel %vm1354, %v1347, %v1351
      %v1356 = vand.u32 2147483647, %v1059
      %vm1357 = vcmp.eq.f32.partialorder %v1356, 8.507059e+37
      %v1358 = vand.u32 %v1059, 2147483648
      %v1359 = vor.u32 1.1754944e-38, %v1358
      %v1360 = vsel %vm1357, %v1359, %v1355
      %v1361 = vmul.f32 1.0, %v1360
      %v1362 = vrcp.pop %v1060
      %v1363 = vmul.f32 %v1060, %v1362
      %v1364 = vsub.f32 1.0, %v1363
      %v1365 = vmul.f32 %v1362, %v1364
      %v1366 = vadd.f32 %v1362, %v1365
      %vm1367 = vweird.f32 %v1060
      %vm1368 = vweird.f32 %v1362
      %vm1369 = vmor %vm1367, %vm1368
      %v1370 = vsel %vm1369, %v1362, %v1366
      %v1371 = vand.u32 2147483647, %v1060
      %vm1372 = vcmp.eq.f32.partialorder %v1371, 8.507059e+37
      %v1373 = vand.u32 %v1060, 2147483648
      %v1374 = vor.u32 1.1754944e-38, %v1373
      %v1375 = vsel %vm1372, %v1374, %v1370
      %v1376 = vmul.f32 1.0, %v1375
      %v1377 = vrcp.pop %v1061
      %v1378 = vmul.f32 %v1061, %v1377
      %v1379 = vsub.f32 1.0, %v1378
      %v1380 = vmul.f32 %v1377, %v1379
      %v1381 = vadd.f32 %v1377, %v1380
      %vm1382 = vweird.f32 %v1061
      %vm1383 = vweird.f32 %v1377
      %vm1384 = vmor %vm1382, %vm1383
      %v1385 = vsel %vm1384, %v1377, %v1381
      %v1386 = vand.u32 2147483647, %v1061
      %vm1387 = vcmp.eq.f32.partialorder %v1386, 8.507059e+37
      %v1388 = vand.u32 %v1061, 2147483648
      %v1389 = vor.u32 1.1754944e-38, %v1388
      %v1390 = vsel %vm1387, %v1389, %v1385
      %v1391 = vmul.f32 1.0, %v1390
      %v1392 = vrcp.pop %v1062
      %v1393 = vmul.f32 %v1062, %v1392
      %v1394 = vsub.f32 1.0, %v1393
      %v1395 = vmul.f32 %v1392, %v1394
      %v1396 = vadd.f32 %v1392, %v1395
      %vm1397 = vweird.f32 %v1062
      %vm1398 = vweird.f32 %v1392
      %vm1399 = vmor %vm1397, %vm1398
      %v1400 = vsel %vm1399, %v1392, %v1396
      %v1401 = vand.u32 2147483647, %v1062
      %vm1402 = vcmp.eq.f32.partialorder %v1401, 8.507059e+37
      %v1403 = vand.u32 %v1062, 2147483648
      %v1404 = vor.u32 1.1754944e-38, %v1403
      %v1405 = vsel %vm1402, %v1404, %v1400
      %v1406 = vmul.f32 1.0, %v1405
      %v1407 = vrcp.pop %v1063
      %v1408 = vmul.f32 %v1063, %v1407
      %v1409 = vsub.f32 1.0, %v1408
      %v1410 = vmul.f32 %v1407, %v1409
      %v1411 = vadd.f32 %v1407, %v1410
      %vm1412 = vweird.f32 %v1063
      %vm1413 = vweird.f32 %v1407
      %vm1414 = vmor %vm1412, %vm1413
      %v1415 = vsel %vm1414, %v1407, %v1411
      %v1416 = vand.u32 2147483647, %v1063
      %vm1417 = vcmp.eq.f32.partialorder %v1416, 8.507059e+37
      %v1418 = vand.u32 %v1063, 2147483648
      %v1419 = vor.u32 1.1754944e-38, %v1418
      %v1420 = vsel %vm1417, %v1419, %v1415
      %v1421 = vmul.f32 1.0, %v1420
      %v1422 = vrcp.pop %v1064
      %v1423 = vmul.f32 %v1064, %v1422
      %v1424 = vsub.f32 1.0, %v1423
      %v1425 = vmul.f32 %v1422, %v1424
      %v1426 = vadd.f32 %v1422, %v1425
      %vm1427 = vweird.f32 %v1064
      %vm1428 = vweird.f32 %v1422
      %vm1429 = vmor %vm1427, %vm1428
      %v1430 = vsel %vm1429, %v1422, %v1426
      %v1431 = vand.u32 2147483647, %v1064
      %vm1432 = vcmp.eq.f32.partialorder %v1431, 8.507059e+37
      %v1433 = vand.u32 %v1064, 2147483648
      %v1434 = vor.u32 1.1754944e-38, %v1433
      %v1435 = vsel %vm1432, %v1434, %v1430
      %v1436 = vmul.f32 1.0, %v1435
      %v1437 = vrcp.pop %v1065
      %v1438 = vmul.f32 %v1065, %v1437
      %v1439 = vsub.f32 1.0, %v1438
      %v1440 = vmul.f32 %v1437, %v1439
      %v1441 = vadd.f32 %v1437, %v1440
      %vm1442 = vweird.f32 %v1065
      %vm1443 = vweird.f32 %v1437
      %vm1444 = vmor %vm1442, %vm1443
      %v1445 = vsel %vm1444, %v1437, %v1441
      %v1446 = vand.u32 2147483647, %v1065
      %vm1447 = vcmp.eq.f32.partialorder %v1446, 8.507059e+37
      %v1448 = vand.u32 %v1065, 2147483648
      %v1449 = vor.u32 1.1754944e-38, %v1448
      %v1450 = vsel %vm1447, %v1449, %v1445
      %v1451 = vmul.f32 1.0, %v1450
      %v1452 = vrcp.pop %v1066
      %v1453 = vmul.f32 %v1066, %v1452
      %v1454 = vsub.f32 1.0, %v1453
      %v1455 = vmul.f32 %v1452, %v1454
      %v1456 = vadd.f32 %v1452, %v1455
      %vm1457 = vweird.f32 %v1066
      %vm1458 = vweird.f32 %v1452
      %vm1459 = vmor %vm1457, %vm1458
      %v1460 = vsel %vm1459, %v1452, %v1456
      %v1461 = vand.u32 2147483647, %v1066
      %vm1462 = vcmp.eq.f32.partialorder %v1461, 8.507059e+37
      %v1463 = vand.u32 %v1066, 2147483648
      %v1464 = vor.u32 1.1754944e-38, %v1463
      %v1465 = vsel %vm1462, %v1464, %v1460
      %v1466 = vmul.f32 1.0, %v1465
      %v1467 = vrcp.pop %v1067
      %v1468 = vmul.f32 %v1067, %v1467
      %v1469 = vsub.f32 1.0, %v1468
      %v1470 = vmul.f32 %v1467, %v1469
      %v1471 = vadd.f32 %v1467, %v1470
      %vm1472 = vweird.f32 %v1067
      %vm1473 = vweird.f32 %v1467
      %vm1474 = vmor %vm1472, %vm1473
      %v1475 = vsel %vm1474, %v1467, %v1471
      %v1476 = vand.u32 2147483647, %v1067
      %vm1477 = vcmp.eq.f32.partialorder %v1476, 8.507059e+37
      %v1478 = vand.u32 %v1067, 2147483648
      %v1479 = vor.u32 1.1754944e-38, %v1478
      %v1480 = vsel %vm1477, %v1479, %v1475
      %v1481 = vmul.f32 1.0, %v1480
      %v1482 = vrcp.pop %v1068
      %v1483 = vmul.f32 %v1068, %v1482
      %v1484 = vsub.f32 1.0, %v1483
      %v1485 = vmul.f32 %v1482, %v1484
      %v1486 = vadd.f32 %v1482, %v1485
      %vm1487 = vweird.f32 %v1068
      %vm1488 = vweird.f32 %v1482
      %vm1489 = vmor %vm1487, %vm1488
      %v1490 = vsel %vm1489, %v1482, %v1486
      %v1491 = vand.u32 2147483647, %v1068
      %vm1492 = vcmp.eq.f32.partialorder %v1491, 8.507059e+37
      %v1493 = vand.u32 %v1068, 2147483648
      %v1494 = vor.u32 1.1754944e-38, %v1493
      %v1495 = vsel %vm1492, %v1494, %v1490
      %v1496 = vmul.f32 1.0, %v1495
      %v1497 = vrcp.pop %v1069
      %v1498 = vmul.f32 %v1069, %v1497
      %v1499 = vsub.f32 1.0, %v1498
      %v1500 = vmul.f32 %v1497, %v1499
      %v1501 = vadd.f32 %v1497, %v1500
      %vm1502 = vweird.f32 %v1069
      %vm1503 = vweird.f32 %v1497
      %vm1504 = vmor %vm1502, %vm1503
      %v1505 = vsel %vm1504, %v1497, %v1501
      %v1506 = vand.u32 2147483647, %v1069
      %vm1507 = vcmp.eq.f32.partialorder %v1506, 8.507059e+37
      %v1508 = vand.u32 %v1069, 2147483648
      %v1509 = vor.u32 1.1754944e-38, %v1508
      %v1510 = vsel %vm1507, %v1509, %v1505
      %v1511 = vmul.f32 1.0, %v1510
      %v1512 = vrcp.pop %v1070
      %v1513 = vmul.f32 %v1070, %v1512
      %v1514 = vsub.f32 1.0, %v1513
      %v1515 = vmul.f32 %v1512, %v1514
      %v1516 = vadd.f32 %v1512, %v1515
      %vm1517 = vweird.f32 %v1070
      %vm1518 = vweird.f32 %v1512
      %vm1519 = vmor %vm1517, %vm1518
      %v1520 = vsel %vm1519, %v1512, %v1516
      %v1521 = vand.u32 2147483647, %v1070
      %vm1522 = vcmp.eq.f32.partialorder %v1521, 8.507059e+37
      %v1523 = vand.u32 %v1070, 2147483648
      %v1524 = vor.u32 1.1754944e-38, %v1523
      %v1525 = vsel %vm1522, %v1524, %v1520
      %v1526 = vmul.f32 1.0, %v1525
      %v1527 = vrcp.pop %v1071
      %v1528 = vmul.f32 %v1071, %v1527
      %v1529 = vsub.f32 1.0, %v1528
      %v1530 = vmul.f32 %v1527, %v1529
      %v1531 = vadd.f32 %v1527, %v1530
      %vm1532 = vweird.f32 %v1071
      %vm1533 = vweird.f32 %v1527
      %vm1534 = vmor %vm1532, %vm1533
      %v1535 = vsel %vm1534, %v1527, %v1531
      %v1536 = vand.u32 2147483647, %v1071
      %vm1537 = vcmp.eq.f32.partialorder %v1536, 8.507059e+37
      %v1538 = vand.u32 %v1071, 2147483648
      %v1539 = vor.u32 1.1754944e-38, %v1538
      %v1540 = vsel %vm1537, %v1539, %v1535
      %v1541 = vmul.f32 1.0, %v1540
      %v1542 = vrcp.pop %v1072
      %v1543 = vmul.f32 %v1072, %v1542
      %v1544 = vsub.f32 1.0, %v1543
      %v1545 = vmul.f32 %v1542, %v1544
      %v1546 = vadd.f32 %v1542, %v1545
      %vm1547 = vweird.f32 %v1072
      %vm1548 = vweird.f32 %v1542
      %vm1549 = vmor %vm1547, %vm1548
      %v1550 = vsel %vm1549, %v1542, %v1546
      %v1551 = vand.u32 2147483647, %v1072
      %vm1552 = vcmp.eq.f32.partialorder %v1551, 8.507059e+37
      %v1553 = vand.u32 %v1072, 2147483648
      %v1554 = vor.u32 1.1754944e-38, %v1553
      %v1555 = vsel %vm1552, %v1554, %v1550
      %v1556 = vmul.f32 1.0, %v1555
      %v1557 = vrcp.pop %v1073
      %v1558 = vmul.f32 %v1073, %v1557
      %v1559 = vsub.f32 1.0, %v1558
      %v1560 = vmul.f32 %v1557, %v1559
      %v1561 = vadd.f32 %v1557, %v1560
      %vm1562 = vweird.f32 %v1073
      %vm1563 = vweird.f32 %v1557
      %vm1564 = vmor %vm1562, %vm1563
      %v1565 = vsel %vm1564, %v1557, %v1561
      %v1566 = vand.u32 2147483647, %v1073
      %vm1567 = vcmp.eq.f32.partialorder %v1566, 8.507059e+37
      %v1568 = vand.u32 %v1073, 2147483648
      %v1569 = vor.u32 1.1754944e-38, %v1568
      %v1570 = vsel %vm1567, %v1569, %v1565
      %v1571 = vmul.f32 1.0, %v1570
      %v1572 = vrcp.pop %v1074
      %v1573 = vmul.f32 %v1074, %v1572
      %v1574 = vsub.f32 1.0, %v1573
      %v1575 = vmul.f32 %v1572, %v1574
      %v1576 = vadd.f32 %v1572, %v1575
      %vm1577 = vweird.f32 %v1074
      %vm1578 = vweird.f32 %v1572
      %vm1579 = vmor %vm1577, %vm1578
      %v1580 = vsel %vm1579, %v1572, %v1576
      %v1581 = vand.u32 2147483647, %v1074
      %vm1582 = vcmp.eq.f32.partialorder %v1581, 8.507059e+37
      %v1583 = vand.u32 %v1074, 2147483648
      %v1584 = vor.u32 1.1754944e-38, %v1583
      %v1585 = vsel %vm1582, %v1584, %v1580
      %v1586 = vmul.f32 1.0, %v1585
      %v1587 = vrcp.pop %v1075
      %v1588 = vmul.f32 %v1075, %v1587
      %v1589 = vsub.f32 1.0, %v1588
      %v1590 = vmul.f32 %v1587, %v1589
      %v1591 = vadd.f32 %v1587, %v1590
      %vm1592 = vweird.f32 %v1075
      %vm1593 = vweird.f32 %v1587
      %vm1594 = vmor %vm1592, %vm1593
      %v1595 = vsel %vm1594, %v1587, %v1591
      %v1596 = vand.u32 2147483647, %v1075
      %vm1597 = vcmp.eq.f32.partialorder %v1596, 8.507059e+37
      %v1598 = vand.u32 %v1075, 2147483648
      %v1599 = vor.u32 1.1754944e-38, %v1598
      %v1600 = vsel %vm1597, %v1599, %v1595
      %v1601 = vmul.f32 1.0, %v1600
      %v1602 = vrcp.pop %v1076
      %v1603 = vmul.f32 %v1076, %v1602
      %v1604 = vsub.f32 1.0, %v1603
      %v1605 = vmul.f32 %v1602, %v1604
      %v1606 = vadd.f32 %v1602, %v1605
      %vm1607 = vweird.f32 %v1076
      %vm1608 = vweird.f32 %v1602
      %vm1609 = vmor %vm1607, %vm1608
      %v1610 = vsel %vm1609, %v1602, %v1606
      %v1611 = vand.u32 2147483647, %v1076
      %vm1612 = vcmp.eq.f32.partialorder %v1611, 8.507059e+37
      %v1613 = vand.u32 %v1076, 2147483648
      %v1614 = vor.u32 1.1754944e-38, %v1613
      %v1615 = vsel %vm1612, %v1614, %v1610
      %v1616 = vmul.f32 1.0, %v1615
      %v1617 = vrcp.pop %v1077
      %v1618 = vmul.f32 %v1077, %v1617
      %v1619 = vsub.f32 1.0, %v1618
      %v1620 = vmul.f32 %v1617, %v1619
      %v1621 = vadd.f32 %v1617, %v1620
      %vm1622 = vweird.f32 %v1077
      %vm1623 = vweird.f32 %v1617
      %vm1624 = vmor %vm1622, %vm1623
      %v1625 = vsel %vm1624, %v1617, %v1621
      %v1626 = vand.u32 2147483647, %v1077
      %vm1627 = vcmp.eq.f32.partialorder %v1626, 8.507059e+37
      %v1628 = vand.u32 %v1077, 2147483648
      %v1629 = vor.u32 1.1754944e-38, %v1628
      %v1630 = vsel %vm1627, %v1629, %v1625
      %v1631 = vmul.f32 1.0, %v1630
      %v1632 = vrcp.pop %v1078
      %v1633 = vmul.f32 %v1078, %v1632
      %v1634 = vsub.f32 1.0, %v1633
      %v1635 = vmul.f32 %v1632, %v1634
      %v1636 = vadd.f32 %v1632, %v1635
      %vm1637 = vweird.f32 %v1078
      %vm1638 = vweird.f32 %v1632
      %vm1639 = vmor %vm1637, %vm1638
      %v1640 = vsel %vm1639, %v1632, %v1636
      %v1641 = vand.u32 2147483647, %v1078
      %vm1642 = vcmp.eq.f32.partialorder %v1641, 8.507059e+37
      %v1643 = vand.u32 %v1078, 2147483648
      %v1644 = vor.u32 1.1754944e-38, %v1643
      %v1645 = vsel %vm1642, %v1644, %v1640
      %v1646 = vmul.f32 1.0, %v1645
      %v1647 = vrcp.pop %v1079
      %v1648 = vmul.f32 %v1079, %v1647
      %v1649 = vsub.f32 1.0, %v1648
      %v1650 = vmul.f32 %v1647, %v1649
      %v1651 = vadd.f32 %v1647, %v1650
      %vm1652 = vweird.f32 %v1079
      %vm1653 = vweird.f32 %v1647
      %vm1654 = vmor %vm1652, %vm1653
      %v1655 = vsel %vm1654, %v1647, %v1651
      %v1656 = vand.u32 2147483647, %v1079
      %vm1657 = vcmp.eq.f32.partialorder %v1656, 8.507059e+37
      %v1658 = vand.u32 %v1079, 2147483648
      %v1659 = vor.u32 1.1754944e-38, %v1658
      %v1660 = vsel %vm1657, %v1659, %v1655
      %v1661 = vmul.f32 1.0, %v1660
      %v1662 = vrcp.pop %v1080
      %v1663 = vmul.f32 %v1080, %v1662
      %v1664 = vsub.f32 1.0, %v1663
      %v1665 = vmul.f32 %v1662, %v1664
      %v1666 = vadd.f32 %v1662, %v1665
      %vm1667 = vweird.f32 %v1080
      %vm1668 = vweird.f32 %v1662
      %vm1669 = vmor %vm1667, %vm1668
      %v1670 = vsel %vm1669, %v1662, %v1666
      %v1671 = vand.u32 2147483647, %v1080
      %vm1672 = vcmp.eq.f32.partialorder %v1671, 8.507059e+37
      %v1673 = vand.u32 %v1080, 2147483648
      %v1674 = vor.u32 1.1754944e-38, %v1673
      %v1675 = vsel %vm1672, %v1674, %v1670
      %v1676 = vmul.f32 1.0, %v1675
      %v1677 = vrcp.pop %v1081
      %v1678 = vmul.f32 %v1081, %v1677
      %v1679 = vsub.f32 1.0, %v1678
      %v1680 = vmul.f32 %v1677, %v1679
      %v1681 = vadd.f32 %v1677, %v1680
      %vm1682 = vweird.f32 %v1081
      %vm1683 = vweird.f32 %v1677
      %vm1684 = vmor %vm1682, %vm1683
      %v1685 = vsel %vm1684, %v1677, %v1681
      %v1686 = vand.u32 2147483647, %v1081
      %vm1687 = vcmp.eq.f32.partialorder %v1686, 8.507059e+37
      %v1688 = vand.u32 %v1081, 2147483648
      %v1689 = vor.u32 1.1754944e-38, %v1688
      %v1690 = vsel %vm1687, %v1689, %v1685
      %v1691 = vmul.f32 1.0, %v1690
      %v1692 = vrcp.pop %v1082
      %v1693 = vmul.f32 %v1082, %v1692
      %v1694 = vsub.f32 1.0, %v1693
      %v1695 = vmul.f32 %v1692, %v1694
      %v1696 = vadd.f32 %v1692, %v1695
      %vm1697 = vweird.f32 %v1082
      %vm1698 = vweird.f32 %v1692
      %vm1699 = vmor %vm1697, %vm1698
      %v1700 = vsel %vm1699, %v1692, %v1696
      %v1701 = vand.u32 2147483647, %v1082
      %vm1702 = vcmp.eq.f32.partialorder %v1701, 8.507059e+37
      %v1703 = vand.u32 %v1082, 2147483648
      %v1704 = vor.u32 1.1754944e-38, %v1703
      %v1705 = vsel %vm1702, %v1704, %v1700
      %v1706 = vmul.f32 1.0, %v1705
      %v1707 = vrcp.pop %v1083
      %v1708 = vmul.f32 %v1083, %v1707
      %v1709 = vsub.f32 1.0, %v1708
      %v1710 = vmul.f32 %v1707, %v1709
      %v1711 = vadd.f32 %v1707, %v1710
      %vm1712 = vweird.f32 %v1083
      %vm1713 = vweird.f32 %v1707
      %vm1714 = vmor %vm1712, %vm1713
      %v1715 = vsel %vm1714, %v1707, %v1711
      %v1716 = vand.u32 2147483647, %v1083
      %vm1717 = vcmp.eq.f32.partialorder %v1716, 8.507059e+37
      %v1718 = vand.u32 %v1083, 2147483648
      %v1719 = vor.u32 1.1754944e-38, %v1718
      %v1720 = vsel %vm1717, %v1719, %v1715
      %v1721 = vmul.f32 1.0, %v1720
      %v1722 = vrcp.pop %v1084
      %v1723 = vmul.f32 %v1084, %v1722
      %v1724 = vsub.f32 1.0, %v1723
      %v1725 = vmul.f32 %v1722, %v1724
      %v1726 = vadd.f32 %v1722, %v1725
      %vm1727 = vweird.f32 %v1084
      %vm1728 = vweird.f32 %v1722
      %vm1729 = vmor %vm1727, %vm1728
      %v1730 = vsel %vm1729, %v1722, %v1726
      %v1731 = vand.u32 2147483647, %v1084
      %vm1732 = vcmp.eq.f32.partialorder %v1731, 8.507059e+37
      %v1733 = vand.u32 %v1084, 2147483648
      %v1734 = vor.u32 1.1754944e-38, %v1733
      %v1735 = vsel %vm1732, %v1734, %v1730
      %v1736 = vmul.f32 1.0, %v1735
      %v1737 = vrcp.pop %v1085
      %v1738 = vmul.f32 %v1085, %v1737
      %v1739 = vsub.f32 1.0, %v1738
      %v1740 = vmul.f32 %v1737, %v1739
      %v1741 = vadd.f32 %v1737, %v1740
      %vm1742 = vweird.f32 %v1085
      %vm1743 = vweird.f32 %v1737
      %vm1744 = vmor %vm1742, %vm1743
      %v1745 = vsel %vm1744, %v1737, %v1741
      %v1746 = vand.u32 2147483647, %v1085
      %vm1747 = vcmp.eq.f32.partialorder %v1746, 8.507059e+37
      %v1748 = vand.u32 %v1085, 2147483648
      %v1749 = vor.u32 1.1754944e-38, %v1748
      %v1750 = vsel %vm1747, %v1749, %v1745
      %v1751 = vmul.f32 1.0, %v1750
      %v1752 = vrcp.pop %v1086
      %v1753 = vmul.f32 %v1086, %v1752
      %v1754 = vsub.f32 1.0, %v1753
      %v1755 = vmul.f32 %v1752, %v1754
      %v1756 = vadd.f32 %v1752, %v1755
      %vm1757 = vweird.f32 %v1086
      %vm1758 = vweird.f32 %v1752
      %vm1759 = vmor %vm1757, %vm1758
      %v1760 = vsel %vm1759, %v1752, %v1756
      %v1761 = vand.u32 2147483647, %v1086
      %vm1762 = vcmp.eq.f32.partialorder %v1761, 8.507059e+37
      %v1763 = vand.u32 %v1086, 2147483648
      %v1764 = vor.u32 1.1754944e-38, %v1763
      %v1765 = vsel %vm1762, %v1764, %v1760
      %v1766 = vmul.f32 1.0, %v1765
      %v1767 = vrcp.pop %v1087
      %v1768 = vmul.f32 %v1087, %v1767
      %v1769 = vsub.f32 1.0, %v1768
      %v1770 = vmul.f32 %v1767, %v1769
      %v1771 = vadd.f32 %v1767, %v1770
      %vm1772 = vweird.f32 %v1087
      %vm1773 = vweird.f32 %v1767
      %vm1774 = vmor %vm1772, %vm1773
      %v1775 = vsel %vm1774, %v1767, %v1771
      %v1776 = vand.u32 2147483647, %v1087
      %vm1777 = vcmp.eq.f32.partialorder %v1776, 8.507059e+37
      %v1778 = vand.u32 %v1087, 2147483648
      %v1779 = vor.u32 1.1754944e-38, %v1778
      %v1780 = vsel %vm1777, %v1779, %v1775
      %v1781 = vmul.f32 1.0, %v1780
      %v1782 = vrcp.pop %v1088
      %v1783 = vmul.f32 %v1088, %v1782
      %v1784 = vsub.f32 1.0, %v1783
      %v1785 = vmul.f32 %v1782, %v1784
      %v1786 = vadd.f32 %v1782, %v1785
      %vm1787 = vweird.f32 %v1088
      %vm1788 = vweird.f32 %v1782
      %vm1789 = vmor %vm1787, %vm1788
      %v1790 = vsel %vm1789, %v1782, %v1786
      %v1791 = vand.u32 2147483647, %v1088
      %vm1792 = vcmp.eq.f32.partialorder %v1791, 8.507059e+37
      %v1793 = vand.u32 %v1088, 2147483648
      %v1794 = vor.u32 1.1754944e-38, %v1793
      %v1795 = vsel %vm1792, %v1794, %v1790
      %v1796 = vmul.f32 1.0, %v1795
      %v1797 = vrcp.pop %v1089
      %v1798 = vmul.f32 %v1089, %v1797
      %v1799 = vsub.f32 1.0, %v1798
      %v1800 = vmul.f32 %v1797, %v1799
      %v1801 = vadd.f32 %v1797, %v1800
      %vm1802 = vweird.f32 %v1089
      %vm1803 = vweird.f32 %v1797
      %vm1804 = vmor %vm1802, %vm1803
      %v1805 = vsel %vm1804, %v1797, %v1801
      %v1806 = vand.u32 2147483647, %v1089
      %vm1807 = vcmp.eq.f32.partialorder %v1806, 8.507059e+37
      %v1808 = vand.u32 %v1089, 2147483648
      %v1809 = vor.u32 1.1754944e-38, %v1808
      %v1810 = vsel %vm1807, %v1809, %v1805
      %v1811 = vmul.f32 1.0, %v1810
      %v1812 = vrcp.pop %v1090
      %v1813 = vmul.f32 %v1090, %v1812
      %v1814 = vsub.f32 1.0, %v1813
      %v1815 = vmul.f32 %v1812, %v1814
      %v1816 = vadd.f32 %v1812, %v1815
      %vm1817 = vweird.f32 %v1090
      %vm1818 = vweird.f32 %v1812
      %vm1819 = vmor %vm1817, %vm1818
      %v1820 = vsel %vm1819, %v1812, %v1816
      %v1821 = vand.u32 2147483647, %v1090
      %vm1822 = vcmp.eq.f32.partialorder %v1821, 8.507059e+37
      %v1823 = vand.u32 %v1090, 2147483648
      %v1824 = vor.u32 1.1754944e-38, %v1823
      %v1825 = vsel %vm1822, %v1824, %v1820
      %v1826 = vmul.f32 1.0, %v1825
      %v1827 = vrcp.pop %v1091
      %v1828 = vmul.f32 %v1091, %v1827
      %v1829 = vsub.f32 1.0, %v1828
      %v1830 = vmul.f32 %v1827, %v1829
      %v1831 = vadd.f32 %v1827, %v1830
      %vm1832 = vweird.f32 %v1091
      %vm1833 = vweird.f32 %v1827
      %vm1834 = vmor %vm1832, %vm1833
      %v1835 = vsel %vm1834, %v1827, %v1831
      %v1836 = vand.u32 2147483647, %v1091
      %vm1837 = vcmp.eq.f32.partialorder %v1836, 8.507059e+37
      %v1838 = vand.u32 %v1091, 2147483648
      %v1839 = vor.u32 1.1754944e-38, %v1838
      %v1840 = vsel %vm1837, %v1839, %v1835
      %v1841 = vmul.f32 1.0, %v1840
      %v1842 = vrcp.pop %v1092
      %v1843 = vmul.f32 %v1092, %v1842
      %v1844 = vsub.f32 1.0, %v1843
      %v1845 = vmul.f32 %v1842, %v1844
      %v1846 = vadd.f32 %v1842, %v1845
      %vm1847 = vweird.f32 %v1092
      %vm1848 = vweird.f32 %v1842
      %vm1849 = vmor %vm1847, %vm1848
      %v1850 = vsel %vm1849, %v1842, %v1846
      %v1851 = vand.u32 2147483647, %v1092
      %vm1852 = vcmp.eq.f32.partialorder %v1851, 8.507059e+37
      %v1853 = vand.u32 %v1092, 2147483648
      %v1854 = vor.u32 1.1754944e-38, %v1853
      %v1855 = vsel %vm1852, %v1854, %v1850
      %v1856 = vmul.f32 1.0, %v1855
      %v1857 = vrcp.pop %v1093
      %v1858 = vmul.f32 %v1093, %v1857
      %v1859 = vsub.f32 1.0, %v1858
      %v1860 = vmul.f32 %v1857, %v1859
      %v1861 = vadd.f32 %v1857, %v1860
      %vm1862 = vweird.f32 %v1093
      %vm1863 = vweird.f32 %v1857
      %vm1864 = vmor %vm1862, %vm1863
      %v1865 = vsel %vm1864, %v1857, %v1861
      %v1866 = vand.u32 2147483647, %v1093
      %vm1867 = vcmp.eq.f32.partialorder %v1866, 8.507059e+37
      %v1868 = vand.u32 %v1093, 2147483648
      %v1869 = vor.u32 1.1754944e-38, %v1868
      %v1870 = vsel %vm1867, %v1869, %v1865
      %v1871 = vmul.f32 1.0, %v1870
      %v1872 = vrcp.pop %v1094
      %v1873 = vmul.f32 %v1094, %v1872
      %v1874 = vsub.f32 1.0, %v1873
      %v1875 = vmul.f32 %v1872, %v1874
      %v1876 = vadd.f32 %v1872, %v1875
      %vm1877 = vweird.f32 %v1094
      %vm1878 = vweird.f32 %v1872
      %vm1879 = vmor %vm1877, %vm1878
      %v1880 = vsel %vm1879, %v1872, %v1876
      %v1881 = vand.u32 2147483647, %v1094
      %vm1882 = vcmp.eq.f32.partialorder %v1881, 8.507059e+37
      %v1883 = vand.u32 %v1094, 2147483648
      %v1884 = vor.u32 1.1754944e-38, %v1883
      %v1885 = vsel %vm1882, %v1884, %v1880
      %v1886 = vmul.f32 1.0, %v1885
      %v1887 = vrcp.pop %v1095
      %v1888 = vmul.f32 %v1095, %v1887
      %v1889 = vsub.f32 1.0, %v1888
      %v1890 = vmul.f32 %v1887, %v1889
      %v1891 = vadd.f32 %v1887, %v1890
      %vm1892 = vweird.f32 %v1095
      %vm1893 = vweird.f32 %v1887
      %vm1894 = vmor %vm1892, %vm1893
      %v1895 = vsel %vm1894, %v1887, %v1891
      %v1896 = vand.u32 2147483647, %v1095
      %vm1897 = vcmp.eq.f32.partialorder %v1896, 8.507059e+37
      %v1898 = vand.u32 %v1095, 2147483648
      %v1899 = vor.u32 1.1754944e-38, %v1898
      %v1900 = vsel %vm1897, %v1899, %v1895
      %v1901 = vmul.f32 1.0, %v1900
      %v1902 = vrcp.pop %v1096
      %v1903 = vmul.f32 %v1096, %v1902
      %v1904 = vsub.f32 1.0, %v1903
      %v1905 = vmul.f32 %v1902, %v1904
      %v1906 = vadd.f32 %v1902, %v1905
      %vm1907 = vweird.f32 %v1096
      %vm1908 = vweird.f32 %v1902
      %vm1909 = vmor %vm1907, %vm1908
      %v1910 = vsel %vm1909, %v1902, %v1906
      %v1911 = vand.u32 2147483647, %v1096
      %vm1912 = vcmp.eq.f32.partialorder %v1911, 8.507059e+37
      %v1913 = vand.u32 %v1096, 2147483648
      %v1914 = vor.u32 1.1754944e-38, %v1913
      %v1915 = vsel %vm1912, %v1914, %v1910
      %v1916 = vmul.f32 1.0, %v1915
      %v1917 = vrcp.pop %v1097
      %v1918 = vmul.f32 %v1097, %v1917
      %v1919 = vsub.f32 1.0, %v1918
      %v1920 = vmul.f32 %v1917, %v1919
      %v1921 = vadd.f32 %v1917, %v1920
      %vm1922 = vweird.f32 %v1097
      %vm1923 = vweird.f32 %v1917
      %vm1924 = vmor %vm1922, %vm1923
      %v1925 = vsel %vm1924, %v1917, %v1921
      %v1926 = vand.u32 2147483647, %v1097
      %vm1927 = vcmp.eq.f32.partialorder %v1926, 8.507059e+37
      %v1928 = vand.u32 %v1097, 2147483648
      %v1929 = vor.u32 1.1754944e-38, %v1928
      %v1930 = vsel %vm1927, %v1929, %v1925
      %v1931 = vmul.f32 1.0, %v1930
      %v1932 = vrcp.pop %v1098
      %v1933 = vmul.f32 %v1098, %v1932
      %v1934 = vsub.f32 1.0, %v1933
      %v1935 = vmul.f32 %v1932, %v1934
      %v1936 = vadd.f32 %v1932, %v1935
      %vm1937 = vweird.f32 %v1098
      %vm1938 = vweird.f32 %v1932
      %vm1939 = vmor %vm1937, %vm1938
      %v1940 = vsel %vm1939, %v1932, %v1936
      %v1941 = vand.u32 2147483647, %v1098
      %vm1942 = vcmp.eq.f32.partialorder %v1941, 8.507059e+37
      %v1943 = vand.u32 %v1098, 2147483648
      %v1944 = vor.u32 1.1754944e-38, %v1943
      %v1945 = vsel %vm1942, %v1944, %v1940
      %v1946 = vmul.f32 1.0, %v1945
      %v1947 = vrcp.pop %v1099
      %v1948 = vmul.f32 %v1099, %v1947
      %v1949 = vsub.f32 1.0, %v1948
      %v1950 = vmul.f32 %v1947, %v1949
      %v1951 = vadd.f32 %v1947, %v1950
      %vm1952 = vweird.f32 %v1099
      %vm1953 = vweird.f32 %v1947
      %vm1954 = vmor %vm1952, %vm1953
      %v1955 = vsel %vm1954, %v1947, %v1951
      %v1956 = vand.u32 2147483647, %v1099
      %vm1957 = vcmp.eq.f32.partialorder %v1956, 8.507059e+37
      %v1958 = vand.u32 %v1099, 2147483648
      %v1959 = vor.u32 1.1754944e-38, %v1958
      %v1960 = vsel %vm1957, %v1959, %v1955
      %v1961 = vmul.f32 1.0, %v1960
      %v1962 = vrcp.pop %v1100
      %v1963 = vmul.f32 %v1100, %v1962
      %v1964 = vsub.f32 1.0, %v1963
      %v1965 = vmul.f32 %v1962, %v1964
      %v1966 = vadd.f32 %v1962, %v1965
      %vm1967 = vweird.f32 %v1100
      %vm1968 = vweird.f32 %v1962
      %vm1969 = vmor %vm1967, %vm1968
      %v1970 = vsel %vm1969, %v1962, %v1966
      %v1971 = vand.u32 2147483647, %v1100
      %vm1972 = vcmp.eq.f32.partialorder %v1971, 8.507059e+37
      %v1973 = vand.u32 %v1100, 2147483648
      %v1974 = vor.u32 1.1754944e-38, %v1973
      %v1975 = vsel %vm1972, %v1974, %v1970
      %v1976 = vmul.f32 1.0, %v1975
      %v1977 = vrcp.pop %v1101
      %v1978 = vmul.f32 %v1101, %v1977
      %v1979 = vsub.f32 1.0, %v1978
      %v1980 = vmul.f32 %v1977, %v1979
      %v1981 = vadd.f32 %v1977, %v1980
      %vm1982 = vweird.f32 %v1101
      %vm1983 = vweird.f32 %v1977
      %vm1984 = vmor %vm1982, %vm1983
      %v1985 = vsel %vm1984, %v1977, %v1981
      %v1986 = vand.u32 2147483647, %v1101
      %vm1987 = vcmp.eq.f32.partialorder %v1986, 8.507059e+37
      %v1988 = vand.u32 %v1101, 2147483648
      %v1989 = vor.u32 1.1754944e-38, %v1988
      %v1990 = vsel %vm1987, %v1989, %v1985
      %v1991 = vmul.f32 1.0, %v1990
      %v1992 = vrcp.pop %v1102
      %v1993 = vmul.f32 %v1102, %v1992
      %v1994 = vsub.f32 1.0, %v1993
      %v1995 = vmul.f32 %v1992, %v1994
      %v1996 = vadd.f32 %v1992, %v1995
      %vm1997 = vweird.f32 %v1102
      %vm1998 = vweird.f32 %v1992
      %vm1999 = vmor %vm1997, %vm1998
      %v2000 = vsel %vm1999, %v1992, %v1996
      %v2001 = vand.u32 2147483647, %v1102
      %vm2002 = vcmp.eq.f32.partialorder %v2001, 8.507059e+37
      %v2003 = vand.u32 %v1102, 2147483648
      %v2004 = vor.u32 1.1754944e-38, %v2003
      %v2005 = vsel %vm2002, %v2004, %v2000
      %v2006 = vmul.f32 1.0, %v2005
      %v2007 = vrcp.pop %v1103
      %v2008 = vmul.f32 %v1103, %v2007
      %v2009 = vsub.f32 1.0, %v2008
      %v2010 = vmul.f32 %v2007, %v2009
      %v2011 = vadd.f32 %v2007, %v2010
      %vm2012 = vweird.f32 %v1103
      %vm2013 = vweird.f32 %v2007
      %vm2014 = vmor %vm2012, %vm2013
      %v2015 = vsel %vm2014, %v2007, %v2011
      %v2016 = vand.u32 2147483647, %v1103
      %vm2017 = vcmp.eq.f32.partialorder %v2016, 8.507059e+37
      %v2018 = vand.u32 %v1103, 2147483648
      %v2019 = vor.u32 1.1754944e-38, %v2018
      %v2020 = vsel %vm2017, %v2019, %v2015
      %v2021 = vmul.f32 1.0, %v2020
      %v2022 = vrcp.pop %v1104
      %v2023 = vmul.f32 %v1104, %v2022
      %v2024 = vsub.f32 1.0, %v2023
      %v2025 = vmul.f32 %v2022, %v2024
      %v2026 = vadd.f32 %v2022, %v2025
      %vm2027 = vweird.f32 %v1104
      %vm2028 = vweird.f32 %v2022
      %vm2029 = vmor %vm2027, %vm2028
      %v2030 = vsel %vm2029, %v2022, %v2026
      %v2031 = vand.u32 2147483647, %v1104
      %vm2032 = vcmp.eq.f32.partialorder %v2031, 8.507059e+37
      %v2033 = vand.u32 %v1104, 2147483648
      %v2034 = vor.u32 1.1754944e-38, %v2033
      %v2035 = vsel %vm2032, %v2034, %v2030
      %v2036 = vmul.f32 1.0, %v2035
      %v2037 = vrcp.pop %v1105
      %v2038 = vmul.f32 %v1105, %v2037
      %v2039 = vsub.f32 1.0, %v2038
      %v2040 = vmul.f32 %v2037, %v2039
      %v2041 = vadd.f32 %v2037, %v2040
      %vm2042 = vweird.f32 %v1105
      %vm2043 = vweird.f32 %v2037
      %vm2044 = vmor %vm2042, %vm2043
      %v2045 = vsel %vm2044, %v2037, %v2041
      %v2046 = vand.u32 2147483647, %v1105
      %vm2047 = vcmp.eq.f32.partialorder %v2046, 8.507059e+37
      %v2048 = vand.u32 %v1105, 2147483648
      %v2049 = vor.u32 1.1754944e-38, %v2048
      %v2050 = vsel %vm2047, %v2049, %v2045
      %v2051 = vmul.f32 1.0, %v2050
      %v2052 = vrcp.pop %v1106
      %v2053 = vmul.f32 %v1106, %v2052
      %v2054 = vsub.f32 1.0, %v2053
      %v2055 = vmul.f32 %v2052, %v2054
      %v2056 = vadd.f32 %v2052, %v2055
      %vm2057 = vweird.f32 %v1106
      %vm2058 = vweird.f32 %v2052
      %vm2059 = vmor %vm2057, %vm2058
      %v2060 = vsel %vm2059, %v2052, %v2056
      %v2061 = vand.u32 2147483647, %v1106
      %vm2062 = vcmp.eq.f32.partialorder %v2061, 8.507059e+37
      %v2063 = vand.u32 %v1106, 2147483648
      %v2064 = vor.u32 1.1754944e-38, %v2063
      %v2065 = vsel %vm2062, %v2064, %v2060
      %v2066 = vmul.f32 1.0, %v2065
      %v2067 = vmul.f32 %v787, %v1121
      %v2068 = vmul.f32 %v788, %v1136
      %v2069 = vmul.f32 %v789, %v1151
      %v2070 = vmul.f32 %v790, %v1166
      %v2071 = vmul.f32 %v791, %v1181
      %v2072 = vmul.f32 %v792, %v1196
      %v2073 = vmul.f32 %v793, %v1211
      %v2074 = vmul.f32 %v794, %v1226
      %v2075 = vmul.f32 %v795, %v1241
      %v2076 = vmul.f32 %v796, %v1256
      %v2077 = vmul.f32 %v797, %v1271
      %v2078 = vmul.f32 %v798, %v1286
      %v2079 = vmul.f32 %v799, %v1301
      %v2080 = vmul.f32 %v800, %v1316
      %v2081 = vmul.f32 %v801, %v1331
      %v2082 = vmul.f32 %v802, %v1346
      %v2083 = vmul.f32 %v803, %v1361
      %v2084 = vmul.f32 %v804, %v1376
      %v2085 = vmul.f32 %v805, %v1391
      %v2086 = vmul.f32 %v806, %v1406
      %v2087 = vmul.f32 %v807, %v1421
      %v2088 = vmul.f32 %v808, %v1436
      %v2089 = vmul.f32 %v809, %v1451
      %v2090 = vmul.f32 %v810, %v1466
      %v2091 = vmul.f32 %v811, %v1481
      %v2092 = vmul.f32 %v812, %v1496
      %v2093 = vmul.f32 %v813, %v1511
      %v2094 = vmul.f32 %v814, %v1526
      %v2095 = vmul.f32 %v815, %v1541
      %v2096 = vmul.f32 %v816, %v1556
      %v2097 = vmul.f32 %v817, %v1571
      %v2098 = vmul.f32 %v818, %v1586
      %v2099 = vmul.f32 %v819, %v1601
      %v2100 = vmul.f32 %v820, %v1616
      %v2101 = vmul.f32 %v821, %v1631
      %v2102 = vmul.f32 %v822, %v1646
      %v2103 = vmul.f32 %v823, %v1661
      %v2104 = vmul.f32 %v824, %v1676
      %v2105 = vmul.f32 %v825, %v1691
      %v2106 = vmul.f32 %v826, %v1706
      %v2107 = vmul.f32 %v827, %v1721
      %v2108 = vmul.f32 %v828, %v1736
      %v2109 = vmul.f32 %v829, %v1751
      %v2110 = vmul.f32 %v830, %v1766
      %v2111 = vmul.f32 %v831, %v1781
      %v2112 = vmul.f32 %v832, %v1796
      %v2113 = vmul.f32 %v833, %v1811
      %v2114 = vmul.f32 %v834, %v1826
      %v2115 = vmul.f32 %v835, %v1841
      %v2116 = vmul.f32 %v836, %v1856
      %v2117 = vmul.f32 %v837, %v1871
      %v2118 = vmul.f32 %v838, %v1886
      %v2119 = vmul.f32 %v839, %v1901
      %v2120 = vmul.f32 %v840, %v1916
      %v2121 = vmul.f32 %v841, %v1931
      %v2122 = vmul.f32 %v842, %v1946
      %v2123 = vmul.f32 %v843, %v1961
      %v2124 = vmul.f32 %v844, %v1976
      %v2125 = vmul.f32 %v845, %v1991
      %v2126 = vmul.f32 %v846, %v2006
      %v2127 = vmul.f32 %v847, %v2021
      %v2128 = vmul.f32 %v848, %v2036
      %v2129 = vmul.f32 %v849, %v2051
      %v2130 = vmul.f32 %v850, %v2066
      %v2131 = vsel %vm302, %v2067, 0.0
      %v2132 = vsel %vm302, %v2075, 0.0
      %v2133 = vadd.f32 %v2131, %v2132
      %v2134 = vsel %vm302, %v2083, 0.0
      %v2135 = vadd.f32 %v2133, %v2134
      %v2136 = vsel %vm302, %v2091, 0.0
      %v2137 = vadd.f32 %v2135, %v2136
      %v2138 = vsel %vm302, %v2099, 0.0
      %v2139 = vadd.f32 %v2137, %v2138
      %v2140 = vsel %vm302, %v2107, 0.0
      %v2141 = vadd.f32 %v2139, %v2140
      %v2142 = vsel %vm302, %v2115, 0.0
      %v2143 = vadd.f32 %v2141, %v2142
      %v2144 = vsel %vm302, %v2123, 0.0
      %v2145 = vadd.f32 %v2143, %v2144
      %v2146 = vsel %vm302, %v2068, 0.0
      %v2147 = vsel %vm302, %v2076, 0.0
      %v2148 = vadd.f32 %v2146, %v2147
      %v2149 = vsel %vm302, %v2084, 0.0
      %v2150 = vadd.f32 %v2148, %v2149
      %v2151 = vsel %vm302, %v2092, 0.0
      %v2152 = vadd.f32 %v2150, %v2151
      %v2153 = vsel %vm302, %v2100, 0.0
      %v2154 = vadd.f32 %v2152, %v2153
      %v2155 = vsel %vm302, %v2108, 0.0
      %v2156 = vadd.f32 %v2154, %v2155
      %v2157 = vsel %vm302, %v2116, 0.0
      %v2158 = vadd.f32 %v2156, %v2157
      %v2159 = vsel %vm302, %v2124, 0.0
      %v2160 = vadd.f32 %v2158, %v2159
      %v2161 = vsel %vm302, %v2069, 0.0
      %v2162 = vsel %vm302, %v2077, 0.0
      %v2163 = vadd.f32 %v2161, %v2162
      %v2164 = vsel %vm302, %v2085, 0.0
      %v2165 = vadd.f32 %v2163, %v2164
      %v2166 = vsel %vm302, %v2093, 0.0
      %v2167 = vadd.f32 %v2165, %v2166
      %v2168 = vsel %vm302, %v2101, 0.0
      %v2169 = vadd.f32 %v2167, %v2168
      %v2170 = vsel %vm302, %v2109, 0.0
      %v2171 = vadd.f32 %v2169, %v2170
      %v2172 = vsel %vm302, %v2117, 0.0
      %v2173 = vadd.f32 %v2171, %v2172
      %v2174 = vsel %vm302, %v2125, 0.0
      %v2175 = vadd.f32 %v2173, %v2174
      %v2176 = vsel %vm302, %v2070, 0.0
      %v2177 = vsel %vm302, %v2078, 0.0
      %v2178 = vadd.f32 %v2176, %v2177
      %v2179 = vsel %vm302, %v2086, 0.0
      %v2180 = vadd.f32 %v2178, %v2179
      %v2181 = vsel %vm302, %v2094, 0.0
      %v2182 = vadd.f32 %v2180, %v2181
      %v2183 = vsel %vm302, %v2102, 0.0
      %v2184 = vadd.f32 %v2182, %v2183
      %v2185 = vsel %vm302, %v2110, 0.0
      %v2186 = vadd.f32 %v2184, %v2185
      %v2187 = vsel %vm302, %v2118, 0.0
      %v2188 = vadd.f32 %v2186, %v2187
      %v2189 = vsel %vm302, %v2126, 0.0
      %v2190 = vadd.f32 %v2188, %v2189
      %v2191 = vsel %vm302, %v2071, 0.0
      %v2192 = vsel %vm302, %v2079, 0.0
      %v2193 = vadd.f32 %v2191, %v2192
      %v2194 = vsel %vm302, %v2087, 0.0
      %v2195 = vadd.f32 %v2193, %v2194
      %v2196 = vsel %vm302, %v2095, 0.0
      %v2197 = vadd.f32 %v2195, %v2196
      %v2198 = vsel %vm302, %v2103, 0.0
      %v2199 = vadd.f32 %v2197, %v2198
      %v2200 = vsel %vm302, %v2111, 0.0
      %v2201 = vadd.f32 %v2199, %v2200
      %v2202 = vsel %vm302, %v2119, 0.0
      %v2203 = vadd.f32 %v2201, %v2202
      %v2204 = vsel %vm302, %v2127, 0.0
      %v2205 = vadd.f32 %v2203, %v2204
      %v2206 = vsel %vm302, %v2072, 0.0
      %v2207 = vsel %vm302, %v2080, 0.0
      %v2208 = vadd.f32 %v2206, %v2207
      %v2209 = vsel %vm302, %v2088, 0.0
      %v2210 = vadd.f32 %v2208, %v2209
      %v2211 = vsel %vm302, %v2096, 0.0
      %v2212 = vadd.f32 %v2210, %v2211
      %v2213 = vsel %vm302, %v2104, 0.0
      %v2214 = vadd.f32 %v2212, %v2213
      %v2215 = vsel %vm302, %v2112, 0.0
      %v2216 = vadd.f32 %v2214, %v2215
      %v2217 = vsel %vm302, %v2120, 0.0
      %v2218 = vadd.f32 %v2216, %v2217
      %v2219 = vsel %vm302, %v2128, 0.0
      %v2220 = vadd.f32 %v2218, %v2219
      %v2221 = vsel %vm302, %v2073, 0.0
      %v2222 = vsel %vm302, %v2081, 0.0
      %v2223 = vadd.f32 %v2221, %v2222
      %v2224 = vsel %vm302, %v2089, 0.0
      %v2225 = vadd.f32 %v2223, %v2224
      %v2226 = vsel %vm302, %v2097, 0.0
      %v2227 = vadd.f32 %v2225, %v2226
      %v2228 = vsel %vm302, %v2105, 0.0
      %v2229 = vadd.f32 %v2227, %v2228
      %v2230 = vsel %vm302, %v2113, 0.0
      %v2231 = vadd.f32 %v2229, %v2230
      %v2232 = vsel %vm302, %v2121, 0.0
      %v2233 = vadd.f32 %v2231, %v2232
      %v2234 = vsel %vm302, %v2129, 0.0
      %v2235 = vadd.f32 %v2233, %v2234
      %v2236 = vsel %vm302, %v2074, 0.0
      %v2237 = vsel %vm302, %v2082, 0.0
      %v2238 = vadd.f32 %v2236, %v2237
      %v2239 = vsel %vm302, %v2090, 0.0
      %v2240 = vadd.f32 %v2238, %v2239
      %v2241 = vsel %vm302, %v2098, 0.0
      %v2242 = vadd.f32 %v2240, %v2241
      %v2243 = vsel %vm302, %v2106, 0.0
      %v2244 = vadd.f32 %v2242, %v2243
      %v2245 = vsel %vm302, %v2114, 0.0
      %v2246 = vadd.f32 %v2244, %v2245
      %v2247 = vsel %vm302, %v2122, 0.0
      %v2248 = vadd.f32 %v2246, %v2247
      %v2249 = vsel %vm302, %v2130, 0.0
      %v2250 = vadd.f32 %v2248, %v2249
      %v2251 = vmul.f32 %v2145, 0.125
      %v2252 = vmul.f32 %v2160, 0.125
      %v2253 = vmul.f32 %v2175, 0.125
      %v2254 = vmul.f32 %v2190, 0.125
      %v2255 = vmul.f32 %v2205, 0.125
      %v2256 = vmul.f32 %v2220, 0.125
      %v2257 = vmul.f32 %v2235, 0.125
      %v2258 = vmul.f32 %v2250, 0.125
      %2259 = vst.msk [vmem:[%s232] sm:$0xff] %vm302, %v2251
      %2260 = vst.msk [vmem:[%s232 + $0x8] sm:$0xff] %vm302, %v2252
      %2261 = vst.msk [vmem:[%s232 + $0x10] sm:$0xff] %vm302, %v2253
      %2262 = vst.msk [vmem:[%s232 + $0x18] sm:$0xff] %vm302, %v2254
      %2263 = vst.msk [vmem:[%s232 + $0x20] sm:$0xff] %vm302, %v2255
      %2264 = vst.msk [vmem:[%s232 + $0x28] sm:$0xff] %vm302, %v2256
      %2265 = vst.msk [vmem:[%s232 + $0x30] sm:$0xff] %vm302, %v2257
      %2266 = vst.msk [vmem:[%s232 + $0x38] sm:$0xff] %vm302, %v2258
      %v2267 = vmul.f32 %v317, 0.125
      %v2268 = vmul.f32 %v332, 0.125
      %v2269 = vmul.f32 %v347, 0.125
      %v2270 = vmul.f32 %v362, 0.125
      %v2271 = vmul.f32 %v377, 0.125
      %v2272 = vmul.f32 %v392, 0.125
      %v2273 = vmul.f32 %v407, 0.125
      %v2274 = vmul.f32 %v422, 0.125
      %2275 = vst.msk [vmem:[%s237] sm:$0xff] %vm302, %v2267
      %2276 = vst.msk [vmem:[%s237 + $0x8] sm:$0xff] %vm302, %v2268
      %2277 = vst.msk [vmem:[%s237 + $0x10] sm:$0xff] %vm302, %v2269
      %2278 = vst.msk [vmem:[%s237 + $0x18] sm:$0xff] %vm302, %v2270
      %2279 = vst.msk [vmem:[%s237 + $0x20] sm:$0xff] %vm302, %v2271
      %2280 = vst.msk [vmem:[%s237 + $0x28] sm:$0xff] %vm302, %v2272
      %2281 = vst.msk [vmem:[%s237 + $0x30] sm:$0xff] %vm302, %v2273
      %2282 = vst.msk [vmem:[%s237 + $0x38] sm:$0xff] %vm302, %v2274
      %p2283 = scmp.lt.s32.totalorder %s17, 1
      %s2284 = scalar_select %p2283, %s17, 1
      %s2285 = smul.addr %s2284, 8
      %s2286 = smul.addr %s2285, 8
      %s2287 = scalar_lea.vmem %s4, %s2286
      %p2288 = scmp.lt.s32.totalorder %s17, 1
      %s2289 = scalar_select %p2288, %s17, 1
      %s2290 = smul.addr %s2289, 8
      %s2291 = smul.addr %s2290, 8
      %s2292 = scalar_lea.vmem %s5, %s2291
      // Predicated region
      $region37: #{tpu_custom_call.1} parent=35 // pred_check
        %p2293 = pneg %p124
      $region38: #{tpu_custom_call.1} parent=35 // pred_check_branch
        %2295 = sbr.rel (%p2293) target = $region40
      $region39: #{tpu_custom_call.1} parent=35 // pred_region
        _
      $region40: #{tpu_custom_call.1} parent=35 // pred_fallthru
        _
      // Predicated region
      $region41: #{tpu_custom_call.1} parent=35 // pred_check
        %p2296 = pneg %p150
      $region42: #{tpu_custom_call.1} parent=35 // pred_check_branch
        %2298 = sbr.rel (%p2296) target = $region44
      $region43: #{tpu_custom_call.1} parent=35 // pred_region
        _
      $region44: #{tpu_custom_call.1} parent=35 // pred_fallthru
        _
    $region36: #{tpu_custom_call.1} parent=5 // pred_fallthru
      _
    %p2299 = scmp.le.s32.totalorder 2, %s12
    // Predicated region
    $region45: #{tpu_custom_call.1} parent=5 // pred_check
      %p2300 = pneg %p2299
    $region46: #{tpu_custom_call.1} parent=5 // pred_check_branch
      %2302 = sbr.rel (%p2300) target = $region48
    $region47: #{tpu_custom_call.1} parent=5 // pred_region
      %s2303 = ssub.s32 %s12, 2
      // Predicated region
      $region49: #{tpu_custom_call.1} parent=47 // pred_check
        %p2304 = pneg %p130
      $region50: #{tpu_custom_call.1} parent=47 // pred_check_branch
        %2306 = sbr.rel (%p2304) target = $region52
      $region51: #{tpu_custom_call.1} parent=47 // pred_region
        %p2307 = scmp.lt.s32.totalorder %s18, 1
        %s2308 = scalar_select %p2307, %s18, 1
        %s2309 = smul.addr %s2308, 8
        %s2310 = smul.addr %s2309, 8
        %s2311 = scalar_lea.vmem %s4, %s2310
      $region52: #{tpu_custom_call.1} parent=47 // pred_fallthru
        _
      // Predicated region
      $region53: #{tpu_custom_call.1} parent=47 // pred_check
        %p2312 = pneg %p156
      $region54: #{tpu_custom_call.1} parent=47 // pred_check_branch
        %2314 = sbr.rel (%p2312) target = $region56
      $region55: #{tpu_custom_call.1} parent=47 // pred_region
        %p2315 = scmp.lt.s32.totalorder %s18, 1
        %s2316 = scalar_select %p2315, %s18, 1
        %s2317 = smul.addr %s2316, 8
        %s2318 = smul.addr %s2317, 8
        %s2319 = scalar_lea.vmem %s5, %s2318
      $region56: #{tpu_custom_call.1} parent=47 // pred_fallthru
        _
    $region48: #{tpu_custom_call.1} parent=5 // pred_fallthru
      _
  $region6: #{tpu_custom_call.1} parent=0 // loop_footer
    %s16 = sadd.s32 1, %s12
  $region7: #{tpu_custom_call.1} parent=0 // loop_footer_branch
    %11 = sbr.rel target = $region3
  $region8: #{tpu_custom_call.1} parent=0 // loop_exit
    _

</llo_original>
